<compile_context>
chip_gen: v7x
topology: tpu7x:2x2x1
jax: 0.10.0
libtpu: 0.0.40
codegen_flags: <defaults>
</compile_context>

<pallas_src>
import jax
import jax.numpy as jnp
from jax import lax
from jax.experimental import pallas as pl
from jax.experimental.pallas import tpu as pltpu


def _round_up(x, m):
    return ((x + m - 1) // m) * m


def _choose_tb(b, target=512):
    """Largest 128-multiple tile <= target that still leaves >=2 grid steps."""
    b_pad128 = _round_up(max(b, 1), 128)
    if b_pad128 <= 128:
        return 128
    tb = min(target, _round_up(b_pad128 // 2, 128))
    return max(tb, 128)


def _metamf_kernel(users_ref, items_ref, ut_ref, it_ref, out_ref):
    users = users_ref[...]                 # (1, TB) int32
    items = items_ref[...]                 # (1, TB) int32
    nu_pad = ut_ref.shape[1]
    ni_pad = it_ref.shape[1]
    tb = users.shape[1]

    # Per-table iota over each (independently padded) table axis; one-hots are
    # built directly in bf16 so the MXU sees bf16 x bf16 with f32 accumulation.
    row_u = lax.broadcasted_iota(jnp.int32, (nu_pad, tb), 0)   # (NU_pad, TB)
    row_i = lax.broadcasted_iota(jnp.int32, (ni_pad, tb), 0)   # (NI_pad, TB)
    oh_u = (row_u == users).astype(jnp.bfloat16)               # (NU_pad, TB)
    oh_i = (row_i == items).astype(jnp.bfloat16)               # (NI_pad, TB)

    # Row gathers as MXU matmuls: (dim, N_pad) @ (N_pad, TB) -> (dim, TB) f32.
    u_lat = jnp.dot(ut_ref[...], oh_u, preferred_element_type=jnp.float32)
    i_lat = jnp.dot(it_ref[...], oh_i, preferred_element_type=jnp.float32)

    # Per-column dot (sublane reduce) -> lane-dense (1, TB), then sigmoid with
    # the reciprocal on the EUP instead of a VPU divide chain.
    preds = jnp.sum(u_lat * i_lat, axis=0, keepdims=True)      # (1, TB) f32
    e = jnp.exp(-preds)
    out_ref[...] = pl.reciprocal(1.0 + e, approx=True)


def prepare_tables(user_w, item_w):
    """One-time (cacheable) prep: transposed, zero-padded, lane-dense bf16 tables.

    Hoisted out of the forward so the O(dim * N_pad) transpose+pad is not
    re-run on every call.
    """
    n_user, dim = user_w.shape
    n_item, dim_i = item_w.shape
    assert dim == dim_i, "user/item embedding dims must match"
    nu_pad = _round_up(max(n_user, 1), 128)
    ni_pad = _round_up(max(n_item, 1), 128)
    ut = jnp.zeros((dim, nu_pad), jnp.bfloat16).at[:, :n_user].set(
        user_w.astype(jnp.bfloat16).T)
    it = jnp.zeros((dim, ni_pad), jnp.bfloat16).at[:, :n_item].set(
        item_w.astype(jnp.bfloat16).T)
    return ut, it


def _table_spec(dim, n_pad, single_buffer):
    if single_buffer and hasattr(pl, "Buffered"):
        # Constant index_map -> no refetch ever happens; one VMEM copy suffices.
        return pl.BlockSpec((dim, n_pad), lambda i: (0, 0),
                            pipeline_mode=pl.Buffered(1))
    return pl.BlockSpec((dim, n_pad), lambda i: (0, 0))


def metamf_forward(users, items, ut, it, *, tb=None):
    """MetaMF.forward: sigmoid(sum(user_w[users] * item_w[items], axis=1)).

    users/items: (B,) integer ids; ut/it: prepared bf16 tables from
    prepare_tables() with shapes (dim, NU_pad) / (dim, NI_pad).
    Returns (B,) float32 (matches torch's sigmoid(preds.reshape(-1))).
    """
    b = int(users.shape[0])
    dim, nu_pad = ut.shape
    dim_i, ni_pad = it.shape
    assert dim == dim_i, "user/item embedding dims must match"

    if tb is None:
        tb = _choose_tb(b)
    b_pad = _round_up(max(b, 1), tb)

    # Lane-dense index vectors, batch padded to a multiple of the tile.
    users2 = jnp.zeros((1, b_pad), jnp.int32).at[0, :b].set(users.astype(jnp.int32))
    items2 = jnp.zeros((1, b_pad), jnp.int32).at[0, :b].set(items.astype(jnp.int32))

    grid = (pl.cdiv(b_pad, tb),)

    def _call(single_buffer_tables):
        in_specs = [
            pl.BlockSpec((1, tb), lambda i: (0, i)),            # users block
            pl.BlockSpec((1, tb), lambda i: (0, i)),            # items block
            _table_spec(dim, nu_pad, single_buffer_tables),      # user table (resident)
            _table_spec(dim, ni_pad, single_buffer_tables),      # item table (resident)
        ]
        return pl.pallas_call(
            _metamf_kernel,
            out_shape=jax.ShapeDtypeStruct((1, b_pad), jnp.float32),
            grid=grid,
            in_specs=in_specs,
            out_specs=pl.BlockSpec((1, tb), lambda i: (0, i)),
            compiler_params=pltpu.CompilerParams(
                dimension_semantics=("parallel",),
                vmem_limit_bytes=48 * 1024 * 1024),
        )(users2, items2, ut, it)

    try:
        out = _call(True)
    except Exception:
        # pipeline_mode=pl.Buffered(1) on top-level pallas_call specs is not
        # supported on every jax build; fall back to default double-buffering.
        out = _call(False)

    return out[0, :b]


def init_params(key, n_user, n_item, dim):
    """Deterministic analogue of kaiming_normal_(mode='fan_out', a=0) on (N, dim)."""
    k_u, k_i = jax.random.split(key)
    user_w = jax.random.normal(k_u, (n_user, dim), jnp.float32) * jnp.sqrt(2.0 / n_user)
    item_w = jax.random.normal(k_i, (n_item, dim), jnp.float32) * jnp.sqrt(2.0 / n_item)
    return user_w, item_w


if __name__ == "__main__":
    key = jax.random.PRNGKey(0)
    n_user, n_item, dim, batch = 50, 40, 32, 300

    k_params, k_u, k_i = jax.random.split(key, 3)
    user_w, item_w = init_params(k_params, n_user, n_item, dim)
    users = jax.random.randint(k_u, (batch,), 0, n_user, dtype=jnp.int32)
    items = jax.random.randint(k_i, (batch,), 0, n_item, dtype=jnp.int32)

    # One-time table prep (hoisted out of the forward path).
    ut, it = prepare_tables(user_w, item_w)

    preds = metamf_forward(users, items, ut, it)
    preds = jax.block_until_ready(preds)

    # pure-JAX f32 reference (gather + dot + sigmoid); bf16 tables in the
    # kernel introduce ~1e-3-level absolute error in preds, well under 5e-3
    # after the sigmoid.
    ref = jax.nn.sigmoid(jnp.sum(user_w[users] * item_w[items], axis=1))
    assert preds.shape == (batch,)
    max_err = float(jnp.max(jnp.abs(preds - ref)))
    assert jnp.allclose(preds, ref, atol=5e-3, rtol=0.0), max_err
    print("KERNEL_OK")
</pallas_src>

<mosaic_0001>
module attributes {stable_mosaic.version = 11 : i64} {
  func.func @_metamf_kernel(%arg0: i32, %arg1: memref<1x256xi32, #tpu.memory_space<vmem>>, %arg2: memref<1x256xi32, #tpu.memory_space<vmem>>, %arg3: memref<32x128xbf16, #tpu.memory_space<vmem>>, %arg4: memref<32x128xbf16, #tpu.memory_space<vmem>>, %arg5: memref<1x256xf32, #tpu.memory_space<vmem>>) attributes {dimension_semantics = [#tpu.dimension_semantics<parallel>], iteration_bounds = array<i64: 2>, scalar_prefetch = 0 : i64, scratch_operands = 0 : i64, tpu.core_type = #tpu.core_type<tc>, window_params = [{transform_indices = @transform_0, window_bounds = array<i64: 1, 256>}, {transform_indices = @transform_1, window_bounds = array<i64: 1, 256>}, {pipeline_mode = #tpu.pipeline_mode<synchronous>, transform_indices = @transform_2, window_bounds = array<i64: 32, 128>}, {pipeline_mode = #tpu.pipeline_mode<synchronous>, transform_indices = @transform_3, window_bounds = array<i64: 32, 128>}, {transform_indices = @transform_4, window_bounds = array<i64: 1, 256>}]} {
    %c0 = arith.constant 0 : index
    %c0_0 = arith.constant 0 : index
    %0 = vector.load %arg1[%c0, %c0_0] : memref<1x256xi32, #tpu.memory_space<vmem>>, vector<1x256xi32>
    %c0_1 = arith.constant 0 : index
    %c0_2 = arith.constant 0 : index
    %1 = vector.load %arg2[%c0_1, %c0_2] : memref<1x256xi32, #tpu.memory_space<vmem>>, vector<1x256xi32>
    %2 = tpu.iota {dimensions = array<i32: 0>} : vector<128x256xi32>
    %3 = tpu.iota {dimensions = array<i32: 0>} : vector<128x256xi32>
    %4 = vector.broadcast %0 : vector<1x256xi32> to vector<128x256xi32>
    %5 = arith.cmpi eq, %2, %4 : vector<128x256xi32>
    %6 = arith.extui %5 : vector<128x256xi1> to vector<128x256xi32>
    %7 = arith.sitofp %6 : vector<128x256xi32> to vector<128x256xf32>
    %8 = arith.truncf %7 : vector<128x256xf32> to vector<128x256xbf16>
    %9 = vector.broadcast %1 : vector<1x256xi32> to vector<128x256xi32>
    %10 = arith.cmpi eq, %3, %9 : vector<128x256xi32>
    %11 = arith.extui %10 : vector<128x256xi1> to vector<128x256xi32>
    %12 = arith.sitofp %11 : vector<128x256xi32> to vector<128x256xf32>
    %13 = arith.truncf %12 : vector<128x256xf32> to vector<128x256xbf16>
    %c0_3 = arith.constant 0 : index
    %c0_4 = arith.constant 0 : index
    %14 = vector.load %arg3[%c0_3, %c0_4] : memref<32x128xbf16, #tpu.memory_space<vmem>>, vector<32x128xbf16>
    %cst = arith.constant dense<0.000000e+00> : vector<32x256xf32>
    %15 = tpu.matmul %14, %8, %cst {dimension_numbers = #tpu.dot_dimension_numbers<[1], [0], [0], [1], [0, 0, 1, 1], [], []>} : vector<32x128xbf16>, vector<128x256xbf16>, vector<32x256xf32> -> vector<32x256xf32>
    %c0_5 = arith.constant 0 : index
    %c0_6 = arith.constant 0 : index
    %16 = vector.load %arg4[%c0_5, %c0_6] : memref<32x128xbf16, #tpu.memory_space<vmem>>, vector<32x128xbf16>
    %cst_7 = arith.constant dense<0.000000e+00> : vector<32x256xf32>
    %17 = tpu.matmul %16, %13, %cst_7 {dimension_numbers = #tpu.dot_dimension_numbers<[1], [0], [0], [1], [0, 0, 1, 1], [], []>} : vector<32x128xbf16>, vector<128x256xbf16>, vector<32x256xf32> -> vector<32x256xf32>
    %18 = arith.mulf %15, %17 : vector<32x256xf32>
    %cst_8 = arith.constant dense<0.000000e+00> : vector<256xf32>
    %19 = vector.multi_reduction <add>, %18, %cst_8 [0] : vector<32x256xf32> to vector<256xf32>
    %20 = vector.shape_cast %19 : vector<256xf32> to vector<1x256xf32>
    %cst_9 = arith.constant 0.000000e+00 : f32
    %21 = vector.broadcast %cst_9 : f32 to vector<1x256xf32>
    %22 = arith.subf %21, %20 : vector<1x256xf32>
    %23 = math.exp %22 : vector<1x256xf32>
    %cst_10 = arith.constant 1.000000e+00 : f32
    %24 = vector.broadcast %cst_10 : f32 to vector<1x256xf32>
    %25 = arith.addf %24, %23 : vector<1x256xf32>
    %26 = tpu.reciprocal %25 {approx = true} : vector<1x256xf32> -> vector<1x256xf32>
    %c0_11 = arith.constant 0 : index
    %c0_12 = arith.constant 0 : index
    %27 = vector.load %arg5[%c0_11, %c0_12] : memref<1x256xf32, #tpu.memory_space<vmem>>, vector<1x256xf32>
    tpu.vector_store %arg5[%c0_11, %c0_12], %26 {strides = array<i32>} : memref<1x256xf32, #tpu.memory_space<vmem>>, vector<1x256xf32>,
    return
  }
  func.func @transform_0(%arg0: i32) -> (i32, i32) {
    %c0_i32 = arith.constant 0 : i32
    %c0_i32_0 = arith.constant 0 : i32
    return %c0_i32, %arg0 : i32, i32
  }
  func.func @transform_1(%arg0: i32) -> (i32, i32) {
    %c0_i32 = arith.constant 0 : i32
    %c0_i32_0 = arith.constant 0 : i32
    return %c0_i32, %arg0 : i32, i32
  }
  func.func @transform_2(%arg0: i32) -> (i32, i32) {
    %c0_i32 = arith.constant 0 : i32
    %c0_i32_0 = arith.constant 0 : i32
    %c0_i32_1 = arith.constant 0 : i32
    return %c0_i32, %c0_i32_0 : i32, i32
  }
  func.func @transform_3(%arg0: i32) -> (i32, i32) {
    %c0_i32 = arith.constant 0 : i32
    %c0_i32_0 = arith.constant 0 : i32
    %c0_i32_1 = arith.constant 0 : i32
    return %c0_i32, %c0_i32_0 : i32, i32
  }
  func.func @transform_4(%arg0: i32) -> (i32, i32) {
    %c0_i32 = arith.constant 0 : i32
    %c0_i32_0 = arith.constant 0 : i32
    return %c0_i32, %arg0 : i32, i32
  }
}

module attributes {stable_mosaic.version = 11 : i64} {
  func.func @_metamf_kernel(%arg0: i32, %arg1: memref<1x256xi32, #tpu.memory_space<vmem>>, %arg2: memref<1x256xi32, #tpu.memory_space<vmem>>, %arg3: memref<32x128xbf16, #tpu.memory_space<vmem>>, %arg4: memref<32x128xbf16, #tpu.memory_space<vmem>>, %arg5: memref<1x256xf32, #tpu.memory_space<vmem>>) attributes {dimension_semantics = [#tpu.dimension_semantics<parallel>], iteration_bounds = array<i64: 2>, scalar_prefetch = 0 : i64, scratch_operands = 0 : i64, tpu.core_type = #tpu.core_type<tc>, window_params = [{transform_indices = @transform_0, window_bounds = array<i64: 1, 256>}, {transform_indices = @transform_1, window_bounds = array<i64: 1, 256>}, {pipeline_mode = #tpu.pipeline_mode<synchronous>, transform_indices = @transform_2, window_bounds = array<i64: 32, 128>}, {pipeline_mode = #tpu.pipeline_mode<synchronous>, transform_indices = @transform_3, window_bounds = array<i64: 32, 128>}, {transform_indices = @transform_4, window_bounds = array<i64: 1, 256>}]} {
    %c0 = arith.constant 0 : index
    %c0_0 = arith.constant 0 : index
    %0 = vector.load %arg1[%c0, %c0_0] : memref<1x256xi32, #tpu.memory_space<vmem>>, vector<1x256xi32>
    %c0_1 = arith.constant 0 : index
    %c0_2 = arith.constant 0 : index
    %1 = vector.load %arg2[%c0_1, %c0_2] : memref<1x256xi32, #tpu.memory_space<vmem>>, vector<1x256xi32>
    %2 = tpu.iota {dimensions = array<i32: 0>} : vector<128x256xi32>
    %3 = tpu.iota {dimensions = array<i32: 0>} : vector<128x256xi32>
    %4 = vector.broadcast %0 : vector<1x256xi32> to vector<128x256xi32>
    %5 = arith.cmpi eq, %2, %4 : vector<128x256xi32>
    %6 = arith.extui %5 : vector<128x256xi1> to vector<128x256xi32>
    %7 = arith.sitofp %6 : vector<128x256xi32> to vector<128x256xf32>
    %8 = arith.truncf %7 : vector<128x256xf32> to vector<128x256xbf16>
    %9 = vector.broadcast %1 : vector<1x256xi32> to vector<128x256xi32>
    %10 = arith.cmpi eq, %3, %9 : vector<128x256xi32>
    %11 = arith.extui %10 : vector<128x256xi1> to vector<128x256xi32>
    %12 = arith.sitofp %11 : vector<128x256xi32> to vector<128x256xf32>
    %13 = arith.truncf %12 : vector<128x256xf32> to vector<128x256xbf16>
    %c0_3 = arith.constant 0 : index
    %c0_4 = arith.constant 0 : index
    %14 = vector.load %arg3[%c0_3, %c0_4] : memref<32x128xbf16, #tpu.memory_space<vmem>>, vector<32x128xbf16>
    %cst = arith.constant dense<0.000000e+00> : vector<32x256xf32>
    %15 = tpu.matmul %14, %8, %cst {dimension_numbers = #tpu.dot_dimension_numbers<[1], [0], [0], [1], [0, 0, 1, 1], [], []>} : vector<32x128xbf16>, vector<128x256xbf16>, vector<32x256xf32> -> vector<32x256xf32>
    %c0_5 = arith.constant 0 : index
    %c0_6 = arith.constant 0 : index
    %16 = vector.load %arg4[%c0_5, %c0_6] : memref<32x128xbf16, #tpu.memory_space<vmem>>, vector<32x128xbf16>
    %cst_7 = arith.constant dense<0.000000e+00> : vector<32x256xf32>
    %17 = tpu.matmul %16, %13, %cst_7 {dimension_numbers = #tpu.dot_dimension_numbers<[1], [0], [0], [1], [0, 0, 1, 1], [], []>} : vector<32x128xbf16>, vector<128x256xbf16>, vector<32x256xf32> -> vector<32x256xf32>
    %18 = arith.mulf %15, %17 : vector<32x256xf32>
    %cst_8 = arith.constant dense<0.000000e+00> : vector<256xf32>
    %19 = vector.multi_reduction <add>, %18, %cst_8 [0] : vector<32x256xf32> to vector<256xf32>
    %20 = vector.shape_cast %19 : vector<256xf32> to vector<1x256xf32>
    %cst_9 = arith.constant 0.000000e+00 : f32
    %21 = vector.broadcast %cst_9 : f32 to vector<1x256xf32>
    %22 = arith.subf %21, %20 : vector<1x256xf32>
    %23 = math.exp %22 : vector<1x256xf32>
    %cst_10 = arith.constant 1.000000e+00 : f32
    %24 = vector.broadcast %cst_10 : f32 to vector<1x256xf32>
    %25 = arith.addf %24, %23 : vector<1x256xf32>
    %26 = tpu.reciprocal %25 {approx = true} : vector<1x256xf32> -> vector<1x256xf32>
    %c0_11 = arith.constant 0 : index
    %c0_12 = arith.constant 0 : index
    %27 = vector.load %arg5[%c0_11, %c0_12] : memref<1x256xf32, #tpu.memory_space<vmem>>, vector<1x256xf32>
    tpu.vector_store %arg5[%c0_11, %c0_12], %26 {strides = array<i32>} : memref<1x256xf32, #tpu.memory_space<vmem>>, vector<1x256xf32>,
    return
  }
  func.func @transform_0(%arg0: i32) -> (i32, i32) {
    %c0_i32 = arith.constant 0 : i32
    %c0_i32_0 = arith.constant 0 : i32
    return %c0_i32, %arg0 : i32, i32
  }
  func.func @transform_1(%arg0: i32) -> (i32, i32) {
    %c0_i32 = arith.constant 0 : i32
    %c0_i32_0 = arith.constant 0 : i32
    return %c0_i32, %arg0 : i32, i32
  }
  func.func @transform_2(%arg0: i32) -> (i32, i32) {
    %c0_i32 = arith.constant 0 : i32
    %c0_i32_0 = arith.constant 0 : i32
    %c0_i32_1 = arith.constant 0 : i32
    return %c0_i32, %c0_i32_0 : i32, i32
  }
  func.func @transform_3(%arg0: i32) -> (i32, i32) {
    %c0_i32 = arith.constant 0 : i32
    %c0_i32_0 = arith.constant 0 : i32
    %c0_i32_1 = arith.constant 0 : i32
    return %c0_i32, %c0_i32_0 : i32, i32
  }
  func.func @transform_4(%arg0: i32) -> (i32, i32) {
    %c0_i32 = arith.constant 0 : i32
    %c0_i32_0 = arith.constant 0 : i32
    return %c0_i32, %arg0 : i32, i32
  }
}

</mosaic_0001>

<llo_original>
// kernel: tpu_custom_call.1
$region0: #{tpu_custom_call.1}
  #allocation0 [shape = 'u32[]', space=smem, size = 0x4, offset = 0x4, fixed_abs, tag = 'smem constant byte address 0x4 - core index']
  #allocation1 [shape = 'u32[144,128]{1,0:T(1,128)}', space=vmem, size = 0x12000, scoped, tag = 'internal scratch']
  %s0 = inlined_call_operand.hbm [shape: s32[1,512], index: 0, kind: input, shape index: {}]
  %s1 = inlined_call_operand.hbm [shape: s32[1,512], index: 1, kind: input, shape index: {}]
  %s2 = inlined_call_operand.hbm [shape: bf16[32,128], index: 2, kind: input, shape index: {}]
  %s3 = inlined_call_operand.hbm [shape: bf16[32,128], index: 3, kind: input, shape index: {}]
  %s4 = inlined_call_operand.hbm [shape: f32[1,512], index: 4, kind: output, shape index: {}]
  %s5 = sld [smem:[#allocation0]]
  $region65: #{tpu_custom_call.1} parent=0
    _
  %s7 = ssub.s32 1, %s5
  %s8 = scalar_select 0, %s7, %s5
  $region1: #{tpu_custom_call.1} parent=0
    #allocation2 [shape = 'u8[2048]{0}', space=vmem, size = 0x800, scoped, tag = 'input window, operand 0']
    #allocation3 [shape = 's32[2]{0}', space=sflag, size = 0x8, scoped, tag = 'scoped memory for tpu_custom_call.1']
    #allocation4 [shape = 's32[2]{0}', space=sflag, size = 0x8, scoped, tag = 'scoped memory for tpu_custom_call.1']
    #allocation5 [shape = 'u8[2048]{0}', space=vmem, size = 0x800, scoped, tag = 'input window, operand 1']
    #allocation6 [shape = 's32[2]{0}', space=sflag, size = 0x8, scoped, tag = 'scoped memory for tpu_custom_call.1']
    #allocation7 [shape = 'u8[8192]{0}', space=vmem, size = 0x2000, scoped, tag = 'input window, operand 2, single buffered']
    #allocation8 [shape = 'u8[8192]{0}', space=vmem, size = 0x2000, scoped, tag = 'input window, operand 3, single buffered']
    #allocation9 [shape = 's32[1]{0}', space=sflag, size = 0x4, scoped, tag = 'scoped memory for tpu_custom_call.1']
    #allocation10 [shape = 'u8[2048]{0}', space=vmem, size = 0x800, scoped, tag = 'output window, operand 0']
    %9 = vsyncpa [#allocation3], 0
    %s10 = scalar_lea.sflag [#allocation3], 1
    %11 = vsyncpa %s10, 0
    %12 = vsyncpa [#allocation6], 0
    %s13 = scalar_lea.sflag [#allocation6], 1
    %14 = vsyncpa %s13, 0
    %15 = vsyncpa [#allocation9], 0
    %16 = vsyncpa [#allocation4], 0
    %s17 = scalar_lea.sflag [#allocation4], 1
    %18 = vsyncpa %s17, 0
    loop: start=0, step=1, limit=4
    $region2: #{tpu_custom_call.1} parent=1 // loop_pre_header
      _
    $region3: #{tpu_custom_call.1} parent=1 // loop_header
      %s20 = sphi 0, %s24
      %p21 = scmp.ge.s32.totalorder %s20, 4
      %s30 = sphi 0, %s32
      %s33 = sphi 0, %s30
      %s34 = sphi 0, %s33
      %s50 = sphi 0, %s34
      %s56 = sphi 0, %s58
      %s59 = sphi 0, %s56
      %s60 = sphi 0, %s59
      %s76 = sphi 0, %s60
      %s80 = sphi 0, %s80
      %s82 = sphi 0, %s80
      %s83 = sphi 0, %s82
      %s97 = sphi 0, %s83
      %s101 = sphi 0, %s101
      %s103 = sphi 0, %s101
      %s104 = sphi 0, %s103
      %s118 = sphi 0, %s104
      %s124 = sphi 0, %s126
      %s127 = sphi 0, %s124
      %s128 = sphi 0, %s127
      %s144 = sphi 0, %s128
    $region4: #{tpu_custom_call.1} parent=1 // loop_header_branch
      %23 = sbr.rel (%p21) target = $region8
    $region5: #{tpu_custom_call.1} parent=1 // loop_body
      %s25 = ssub.s32 %s20, 1
      %s26 = ssub.s32 %s20, 2
      %s27 = sadd.s32 %s20, 1
      %s28 = ssub.s32 %s20, %s27
      %p29 = scmp.eq.s32.totalorder %s28, 0
      %s31 = sadd.s32 %s30, 1
      %s32 = scalar_select %p29, %s30, %s31
      %p35 = pneg %p29
      %p36 = scmp.eq.s32.totalorder %s20, 1
      %p37 = por %p35, %p36
      %p38 = scmp.ne.s32.totalorder %s30, %s33
      %p39 = scmp.eq.s32.totalorder %s20, 0
      %p40 = por %p38, %p39
      %p41 = scmp.ne.s32.totalorder %s30, %s33
      %p42 = scmp.eq.s32.totalorder %s25, 1
      %p43 = por %p41, %p42
      %p44 = scmp.ne.s32.totalorder %s33, %s34
      %p45 = scmp.eq.s32.totalorder %s25, 0
      %p46 = por %p44, %p45
      %p47 = scmp.ne.s32.totalorder %s33, %s34
      %p48 = scmp.eq.s32.totalorder %s26, 1
      %p49 = por %p47, %p48
      %p51 = scmp.ne.s32.totalorder %s34, %s50
      %p52 = scmp.eq.s32.totalorder %s26, 0
      %p53 = por %p51, %p52
      %s54 = ssub.s32 %s20, %s27
      %p55 = scmp.eq.s32.totalorder %s54, 0
      %s57 = sadd.s32 %s56, 1
      %s58 = scalar_select %p55, %s56, %s57
      %p61 = pneg %p55
      %p62 = scmp.eq.s32.totalorder %s20, 1
      %p63 = por %p61, %p62
      %p64 = scmp.ne.s32.totalorder %s56, %s59
      %p65 = scmp.eq.s32.totalorder %s20, 0
      %p66 = por %p64, %p65
      %p67 = scmp.ne.s32.totalorder %s56, %s59
      %p68 = scmp.eq.s32.totalorder %s25, 1
      %p69 = por %p67, %p68
      %p70 = scmp.ne.s32.totalorder %s59, %s60
      %p71 = scmp.eq.s32.totalorder %s25, 0
      %p72 = por %p70, %p71
      %p73 = scmp.ne.s32.totalorder %s59, %s60
      %p74 = scmp.eq.s32.totalorder %s26, 1
      %p75 = por %p73, %p74
      %p77 = scmp.ne.s32.totalorder %s60, %s76
      %p78 = scmp.eq.s32.totalorder %s26, 0
      %p79 = por %p77, %p78
      %s81 = sadd.s32 %s80, 1
      %p84 = scmp.eq.s32.totalorder %s20, 1
      %p85 = scmp.ne.s32.totalorder %s80, %s82
      %p86 = scmp.eq.s32.totalorder %s20, 0
      %p87 = por %p85, %p86
      %p88 = scmp.ne.s32.totalorder %s80, %s82
      %p89 = scmp.eq.s32.totalorder %s25, 1
      %p90 = por %p88, %p89
      %p91 = scmp.ne.s32.totalorder %s82, %s83
      %p92 = scmp.eq.s32.totalorder %s25, 0
      %p93 = por %p91, %p92
      %p94 = scmp.ne.s32.totalorder %s82, %s83
      %p95 = scmp.eq.s32.totalorder %s26, 1
      %p96 = por %p94, %p95
      %p98 = scmp.ne.s32.totalorder %s83, %s97
      %p99 = scmp.eq.s32.totalorder %s26, 0
      %p100 = por %p98, %p99
      %s102 = sadd.s32 %s101, 1
      %p105 = scmp.eq.s32.totalorder %s20, 1
      %p106 = scmp.ne.s32.totalorder %s101, %s103
      %p107 = scmp.eq.s32.totalorder %s20, 0
      %p108 = por %p106, %p107
      %p109 = scmp.ne.s32.totalorder %s101, %s103
      %p110 = scmp.eq.s32.totalorder %s25, 1
      %p111 = por %p109, %p110
      %p112 = scmp.ne.s32.totalorder %s103, %s104
      %p113 = scmp.eq.s32.totalorder %s25, 0
      %p114 = por %p112, %p113
      %p115 = scmp.ne.s32.totalorder %s103, %s104
      %p116 = scmp.eq.s32.totalorder %s26, 1
      %p117 = por %p115, %p116
      %p119 = scmp.ne.s32.totalorder %s104, %s118
      %p120 = scmp.eq.s32.totalorder %s26, 0
      %p121 = por %p119, %p120
      %s122 = ssub.s32 %s20, %s27
      %p123 = scmp.eq.s32.totalorder %s122, 0
      %s125 = sadd.s32 %s124, 1
      %s126 = scalar_select %p123, %s124, %s125
      %p129 = pneg %p123
      %p130 = scmp.eq.s32.totalorder %s20, 1
      %p131 = por %p129, %p130
      %p132 = scmp.ne.s32.totalorder %s124, %s127
      %p133 = scmp.eq.s32.totalorder %s20, 0
      %p134 = por %p132, %p133
      %p135 = scmp.ne.s32.totalorder %s124, %s127
      %p136 = scmp.eq.s32.totalorder %s25, 1
      %p137 = por %p135, %p136
      %p138 = scmp.ne.s32.totalorder %s127, %s128
      %p139 = scmp.eq.s32.totalorder %s25, 0
      %p140 = por %p138, %p139
      %p141 = scmp.ne.s32.totalorder %s127, %s128
      %p142 = scmp.eq.s32.totalorder %s26, 1
      %p143 = por %p141, %p142
      %p145 = scmp.ne.s32.totalorder %s128, %s144
      %p146 = scmp.eq.s32.totalorder %s26, 0
      %p147 = por %p145, %p146
      %p148 = scmp.le.s32.totalorder 1, %s20
      %p149 = scmp.lt.s32.totalorder %s20, 3
      %p150 = pnand %p148, %p149
      %p151 = pneg %p150
      // Predicated region
      $region9: #{tpu_custom_call.1} parent=5 // pred_check
        _
      $region10: #{tpu_custom_call.1} parent=5 // pred_check_branch
        %153 = sbr.rel (%p150) target = $region12
      $region11: #{tpu_custom_call.1} parent=5 // pred_region
        %s154 = ssub.s32 %s20, 1
        // Predicated region
        $region13: #{tpu_custom_call.1} parent=11 // pred_check
          %p155 = pneg %p93
        $region14: #{tpu_custom_call.1} parent=11 // pred_check_branch
          %157 = sbr.rel (%p155) target = $region16
        $region15: #{tpu_custom_call.1} parent=11 // pred_region
          %s159 = ssub.s32 256, 256
          %160 = vsyncadd [#allocation6], %s159
          %s161 = sshll.u32 [#allocation7], 4
          %s162 = int_to_ptr.vmem [resolvable:$true] %s161
          %167 = dma.hbm_to_vmem [thread:$0]  %s2, 256, %s162, [#allocation6], 64, 64, 4
        $region16: #{tpu_custom_call.1} parent=11 // pred_fallthru
          _
        // Predicated region
        $region17: #{tpu_custom_call.1} parent=11 // pred_check
          %p168 = pneg %p114
        $region18: #{tpu_custom_call.1} parent=11 // pred_check_branch
          %170 = sbr.rel (%p168) target = $region20
        $region19: #{tpu_custom_call.1} parent=11 // pred_region
          %s172 = ssub.s32 256, 256
          %173 = vsyncadd [#allocation9], %s172
          %s174 = sshll.u32 [#allocation8], 4
          %s175 = int_to_ptr.vmem [resolvable:$true] %s174
          %180 = dma.hbm_to_vmem [thread:$0]  %s3, 256, %s175, [#allocation9], 64, 64, 4
        $region20: #{tpu_custom_call.1} parent=11 // pred_fallthru
          _
      $region12: #{tpu_custom_call.1} parent=5 // pred_fallthru
        _
      %p181 = scmp.lt.s32.totalorder %s20, 2
      // Predicated region
      $region21: #{tpu_custom_call.1} parent=5 // pred_check
        %p182 = pneg %p181
      $region22: #{tpu_custom_call.1} parent=5 // pred_check_branch
        %184 = sbr.rel (%p182) target = $region24
      $region23: #{tpu_custom_call.1} parent=5 // pred_region
        // Predicated region
        $region25: #{tpu_custom_call.1} parent=23 // pred_check
          %p185 = pneg %p40
        $region26: #{tpu_custom_call.1} parent=23 // pred_check_branch
          %187 = sbr.rel (%p185) target = $region28
        $region27: #{tpu_custom_call.1} parent=23 // pred_region
          %s188 = sand.u32 %s30, 1
          %s189 = scalar_lea.sflag [#allocation3], %s188
          %s190 = sand.u32 %s30, 1
          %s191 = smul.addr %s190, 2
          %s192 = scalar_lea.vmem [#allocation2], %s191
          %s193 = smul.u32 2, %s20
          %s195 = ssub.s32 32, 32
          %196 = vsyncadd %s189, %s195
          %s197 = smul.addr %s193, 16
          %s198 = scalar_lea.hbm %s0, %s197
          %s200 = sshll.u32 %s192, 4
          %s201 = int_to_ptr.vmem [resolvable:$true] %s200
          %203 = dma.hbm_to_vmem [thread:$0]  %s198, 32, %s201, %s189
        $region28: #{tpu_custom_call.1} parent=23 // pred_fallthru
          _
        // Predicated region
        $region29: #{tpu_custom_call.1} parent=23 // pred_check
          %p204 = pneg %p66
        $region30: #{tpu_custom_call.1} parent=23 // pred_check_branch
          %206 = sbr.rel (%p204) target = $region32
        $region31: #{tpu_custom_call.1} parent=23 // pred_region
          %s207 = sand.u32 %s20, 1
          %s208 = scalar_lea.sflag [#allocation6], %s207
          %s209 = sand.u32 %s56, 1
          %s210 = smul.addr %s209, 2
          %s211 = scalar_lea.vmem [#allocation5], %s210
          %s212 = smul.u32 2, %s20
          %s214 = ssub.s32 32, 32
          %215 = vsyncadd %s208, %s214
          %s216 = smul.addr %s212, 16
          %s217 = scalar_lea.hbm %s1, %s216
          %s219 = sshll.u32 %s211, 4
          %s220 = int_to_ptr.vmem [resolvable:$true] %s219
          %222 = dma.hbm_to_vmem [thread:$0]  %s217, 32, %s220, %s208
        $region32: #{tpu_custom_call.1} parent=23 // pred_fallthru
          _
      $region24: #{tpu_custom_call.1} parent=5 // pred_fallthru
        _
      %p223 = scmp.le.s32.totalorder 1, %s20
      %p224 = scmp.lt.s32.totalorder %s20, 3
      %p225 = pnand %p223, %p224
      %p226 = pneg %p225
      // Predicated region
      $region33: #{tpu_custom_call.1} parent=5 // pred_check
        _
      $region34: #{tpu_custom_call.1} parent=5 // pred_check_branch
        %228 = sbr.rel (%p225) target = $region36
      $region35: #{tpu_custom_call.1} parent=5 // pred_region
        %s229 = ssub.s32 %s20, 1
        %s230 = sand.u32 %s33, 1
        %s231 = scalar_lea.sflag [#allocation3], %s230
        %s232 = sand.u32 %s33, 1
        %s233 = smul.addr %s232, 2
        %s234 = scalar_lea.vmem [#allocation2], %s233
        // Predicated region
        $region37: #{tpu_custom_call.1} parent=35 // pred_check
          %p235 = pneg %p46
        $region38: #{tpu_custom_call.1} parent=35 // pred_check_branch
          %237 = sbr.rel (%p235) target = $region40
        $region39: #{tpu_custom_call.1} parent=35 // pred_region
          %238 = dma.done %s231, 32
        $region40: #{tpu_custom_call.1} parent=35 // pred_fallthru
          _
        %s239 = sand.u32 %s25, 1
        %s240 = scalar_lea.sflag [#allocation6], %s239
        %s241 = sand.u32 %s59, 1
        %s242 = smul.addr %s241, 2
        %s243 = scalar_lea.vmem [#allocation5], %s242
        // Predicated region
        $region41: #{tpu_custom_call.1} parent=35 // pred_check
          %p244 = pneg %p72
        $region42: #{tpu_custom_call.1} parent=35 // pred_check_branch
          %246 = sbr.rel (%p244) target = $region44
        $region43: #{tpu_custom_call.1} parent=35 // pred_region
          %247 = dma.done %s240, 32
        $region44: #{tpu_custom_call.1} parent=35 // pred_fallthru
          _
        // Predicated region
        $region45: #{tpu_custom_call.1} parent=35 // pred_check
          %p248 = pneg %p93
        $region46: #{tpu_custom_call.1} parent=35 // pred_check_branch
          %250 = sbr.rel (%p248) target = $region48
        $region47: #{tpu_custom_call.1} parent=35 // pred_region
          %251 = dma.done [#allocation6], 256
        $region48: #{tpu_custom_call.1} parent=35 // pred_fallthru
          _
        // Predicated region
        $region49: #{tpu_custom_call.1} parent=35 // pred_check
          %p252 = pneg %p114
        $region50: #{tpu_custom_call.1} parent=35 // pred_check_branch
          %254 = sbr.rel (%p252) target = $region52
        $region51: #{tpu_custom_call.1} parent=35 // pred_region
          %255 = dma.done [#allocation9], 256
        $region52: #{tpu_custom_call.1} parent=35 // pred_fallthru
          _
        %s256 = sand.u32 %s33, 1
        %s257 = scalar_lea.sflag [#allocation3], %s256
        %s258 = sand.u32 %s33, 1
        %s259 = smul.addr %s258, 2
        %s260 = scalar_lea.vmem [#allocation2], %s259
        %p261 = pneg %p46
        %p262 = pneg %p43
        %s263 = sand.u32 %s25, 1
        %s264 = scalar_lea.sflag [#allocation6], %s263
        %s265 = sand.u32 %s59, 1
        %s266 = smul.addr %s265, 2
        %s267 = scalar_lea.vmem [#allocation5], %s266
        %p268 = pneg %p72
        %p269 = pneg %p69
        %p270 = pneg %p93
        %p271 = pneg %p90
        %p272 = pneg %p114
        %p273 = pneg %p111
        %p274 = pneg %p140
        %p275 = pneg %p137
        %s276 = sand.u32 %s127, 1
        %s277 = scalar_lea.sflag [#allocation4], %s276
        %s278 = sand.u32 %s127, 1
        %s279 = smul.addr %s278, 2
        %s280 = scalar_lea.vmem [#allocation10], %s279
        %s281 = smul.u32 2, %s25
        %s282 = smul.u32 2, %s25
        %s283 = smul.u32 2, %s25
        %v285 = vld [vmem:[%s234] sm:$0x3]
        %v286 = vld [vmem:[%s243] sm:$0x3]
        %v287 = vlaneseq
        %v288 = vshrl.u32 %v287, 7
        %v289 = vadd.s32 %v288, 8
        %v290 = vadd.s32 %v288, 16
        %v291 = vadd.s32 %v288, 24
        %v292 = vadd.s32 %v288, 32
        %v293 = vadd.s32 %v288, 40
        %v294 = vadd.s32 %v288, 48
        %v295 = vadd.s32 %v288, 56
        %v296 = vadd.s32 %v288, 64
        %v297 = vadd.s32 %v288, 72
        %v298 = vadd.s32 %v288, 80
        %v299 = vadd.s32 %v288, 88
        %v300 = vadd.s32 %v288, 96
        %v301 = vadd.s32 %v288, 104
        %v302 = vadd.s32 %v288, 112
        %v303 = vadd.s32 %v288, 120
        %v304 = vlaneseq
        %v305 = vshrl.u32 %v304, 7
        %v306 = vsub.s32 0, %v305
        %v307 = vrot.slane %v285, %v306
        %v308 = vlaneseq
        %v309 = vshrl.u32 %v308, 7
        %v310 = vsub.s32 1, %v309
        %v311 = vrot.slane %v285, %v310
        %vm312 = vcmp.eq.s32.totalorder %v288, %v307
        %vm313 = vcmp.eq.s32.totalorder %v288, %v311
        %vm314 = vcmp.eq.s32.totalorder %v289, %v307
        %vm315 = vcmp.eq.s32.totalorder %v289, %v311
        %vm316 = vcmp.eq.s32.totalorder %v290, %v307
        %vm317 = vcmp.eq.s32.totalorder %v290, %v311
        %vm318 = vcmp.eq.s32.totalorder %v291, %v307
        %vm319 = vcmp.eq.s32.totalorder %v291, %v311
        %vm320 = vcmp.eq.s32.totalorder %v292, %v307
        %vm321 = vcmp.eq.s32.totalorder %v292, %v311
        %vm322 = vcmp.eq.s32.totalorder %v293, %v307
        %vm323 = vcmp.eq.s32.totalorder %v293, %v311
        %vm324 = vcmp.eq.s32.totalorder %v294, %v307
        %vm325 = vcmp.eq.s32.totalorder %v294, %v311
        %vm326 = vcmp.eq.s32.totalorder %v295, %v307
        %vm327 = vcmp.eq.s32.totalorder %v295, %v311
        %vm328 = vcmp.eq.s32.totalorder %v296, %v307
        %vm329 = vcmp.eq.s32.totalorder %v296, %v311
        %vm330 = vcmp.eq.s32.totalorder %v297, %v307
        %vm331 = vcmp.eq.s32.totalorder %v297, %v311
        %vm332 = vcmp.eq.s32.totalorder %v298, %v307
        %vm333 = vcmp.eq.s32.totalorder %v298, %v311
        %vm334 = vcmp.eq.s32.totalorder %v299, %v307
        %vm335 = vcmp.eq.s32.totalorder %v299, %v311
        %vm336 = vcmp.eq.s32.totalorder %v300, %v307
        %vm337 = vcmp.eq.s32.totalorder %v300, %v311
        %vm338 = vcmp.eq.s32.totalorder %v301, %v307
        %vm339 = vcmp.eq.s32.totalorder %v301, %v311
        %vm340 = vcmp.eq.s32.totalorder %v302, %v307
        %vm341 = vcmp.eq.s32.totalorder %v302, %v311
        %vm342 = vcmp.eq.s32.totalorder %v303, %v307
        %vm343 = vcmp.eq.s32.totalorder %v303, %v311
        %v344 = vsel %vm312, 1, 0
        %v345 = vsel %vm313, 1, 0
        %v346 = vsel %vm314, 1, 0
        %v347 = vsel %vm315, 1, 0
        %v348 = vsel %vm316, 1, 0
        %v349 = vsel %vm317, 1, 0
        %v350 = vsel %vm318, 1, 0
        %v351 = vsel %vm319, 1, 0
        %v352 = vsel %vm320, 1, 0
        %v353 = vsel %vm321, 1, 0
        %v354 = vsel %vm322, 1, 0
        %v355 = vsel %vm323, 1, 0
        %v356 = vsel %vm324, 1, 0
        %v357 = vsel %vm325, 1, 0
        %v358 = vsel %vm326, 1, 0
        %v359 = vsel %vm327, 1, 0
        %v360 = vsel %vm328, 1, 0
        %v361 = vsel %vm329, 1, 0
        %v362 = vsel %vm330, 1, 0
        %v363 = vsel %vm331, 1, 0
        %v364 = vsel %vm332, 1, 0
        %v365 = vsel %vm333, 1, 0
        %v366 = vsel %vm334, 1, 0
        %v367 = vsel %vm335, 1, 0
        %v368 = vsel %vm336, 1, 0
        %v369 = vsel %vm337, 1, 0
        %v370 = vsel %vm338, 1, 0
        %v371 = vsel %vm339, 1, 0
        %v372 = vsel %vm340, 1, 0
        %v373 = vsel %vm341, 1, 0
        %v374 = vsel %vm342, 1, 0
        %v375 = vsel %vm343, 1, 0
        %v376 = vcvt.s32.f32 %v344
        %v377 = vcvt.s32.f32 %v345
        %v378 = vcvt.s32.f32 %v346
        %v379 = vcvt.s32.f32 %v347
        %v380 = vcvt.s32.f32 %v348
        %v381 = vcvt.s32.f32 %v349
        %v382 = vcvt.s32.f32 %v350
        %v383 = vcvt.s32.f32 %v351
        %v384 = vcvt.s32.f32 %v352
        %v385 = vcvt.s32.f32 %v353
        %v386 = vcvt.s32.f32 %v354
        %v387 = vcvt.s32.f32 %v355
        %v388 = vcvt.s32.f32 %v356
        %v389 = vcvt.s32.f32 %v357
        %v390 = vcvt.s32.f32 %v358
        %v391 = vcvt.s32.f32 %v359
        %v392 = vcvt.s32.f32 %v360
        %v393 = vcvt.s32.f32 %v361
        %v394 = vcvt.s32.f32 %v362
        %v395 = vcvt.s32.f32 %v363
        %v396 = vcvt.s32.f32 %v364
        %v397 = vcvt.s32.f32 %v365
        %v398 = vcvt.s32.f32 %v366
        %v399 = vcvt.s32.f32 %v367
        %v400 = vcvt.s32.f32 %v368
        %v401 = vcvt.s32.f32 %v369
        %v402 = vcvt.s32.f32 %v370
        %v403 = vcvt.s32.f32 %v371
        %v404 = vcvt.s32.f32 %v372
        %v405 = vcvt.s32.f32 %v373
        %v406 = vcvt.s32.f32 %v374
        %v407 = vcvt.s32.f32 %v375
        %v408 = vpack.c.bf16 %v378, %v376
        %v409 = vpack.c.bf16 %v379, %v377
        %v410 = vpack.c.bf16 %v382, %v380
        %v411 = vpack.c.bf16 %v383, %v381
        %v412 = vpack.c.bf16 %v386, %v384
        %v413 = vpack.c.bf16 %v387, %v385
        %v414 = vpack.c.bf16 %v390, %v388
        %v415 = vpack.c.bf16 %v391, %v389
        %v416 = vpack.c.bf16 %v394, %v392
        %v417 = vpack.c.bf16 %v395, %v393
        %v418 = vpack.c.bf16 %v398, %v396
        %v419 = vpack.c.bf16 %v399, %v397
        %v420 = vpack.c.bf16 %v402, %v400
        %v421 = vpack.c.bf16 %v403, %v401
        %v422 = vpack.c.bf16 %v406, %v404
        %v423 = vpack.c.bf16 %v407, %v405
        %v424 = vlaneseq
        %v425 = vshrl.u32 %v424, 7
        %v426 = vsub.s32 0, %v425
        %v427 = vrot.slane %v286, %v426
        %v428 = vlaneseq
        %v429 = vshrl.u32 %v428, 7
        %v430 = vsub.s32 1, %v429
        %v431 = vrot.slane %v286, %v430
        %vm432 = vcmp.eq.s32.totalorder %v288, %v427
        %vm433 = vcmp.eq.s32.totalorder %v288, %v431
        %vm434 = vcmp.eq.s32.totalorder %v289, %v427
        %vm435 = vcmp.eq.s32.totalorder %v289, %v431
        %vm436 = vcmp.eq.s32.totalorder %v290, %v427
        %vm437 = vcmp.eq.s32.totalorder %v290, %v431
        %vm438 = vcmp.eq.s32.totalorder %v291, %v427
        %vm439 = vcmp.eq.s32.totalorder %v291, %v431
        %vm440 = vcmp.eq.s32.totalorder %v292, %v427
        %vm441 = vcmp.eq.s32.totalorder %v292, %v431
        %vm442 = vcmp.eq.s32.totalorder %v293, %v427
        %vm443 = vcmp.eq.s32.totalorder %v293, %v431
        %vm444 = vcmp.eq.s32.totalorder %v294, %v427
        %vm445 = vcmp.eq.s32.totalorder %v294, %v431
        %vm446 = vcmp.eq.s32.totalorder %v295, %v427
        %vm447 = vcmp.eq.s32.totalorder %v295, %v431
        %vm448 = vcmp.eq.s32.totalorder %v296, %v427
        %vm449 = vcmp.eq.s32.totalorder %v296, %v431
        %vm450 = vcmp.eq.s32.totalorder %v297, %v427
        %vm451 = vcmp.eq.s32.totalorder %v297, %v431
        %vm452 = vcmp.eq.s32.totalorder %v298, %v427
        %vm453 = vcmp.eq.s32.totalorder %v298, %v431
        %vm454 = vcmp.eq.s32.totalorder %v299, %v427
        %vm455 = vcmp.eq.s32.totalorder %v299, %v431
        %vm456 = vcmp.eq.s32.totalorder %v300, %v427
        %vm457 = vcmp.eq.s32.totalorder %v300, %v431
        %vm458 = vcmp.eq.s32.totalorder %v301, %v427
        %vm459 = vcmp.eq.s32.totalorder %v301, %v431
        %vm460 = vcmp.eq.s32.totalorder %v302, %v427
        %vm461 = vcmp.eq.s32.totalorder %v302, %v431
        %vm462 = vcmp.eq.s32.totalorder %v303, %v427
        %vm463 = vcmp.eq.s32.totalorder %v303, %v431
        %v464 = vsel %vm432, 1, 0
        %v465 = vsel %vm433, 1, 0
        %v466 = vsel %vm434, 1, 0
        %v467 = vsel %vm435, 1, 0
        %v468 = vsel %vm436, 1, 0
        %v469 = vsel %vm437, 1, 0
        %v470 = vsel %vm438, 1, 0
        %v471 = vsel %vm439, 1, 0
        %v472 = vsel %vm440, 1, 0
        %v473 = vsel %vm441, 1, 0
        %v474 = vsel %vm442, 1, 0
        %v475 = vsel %vm443, 1, 0
        %v476 = vsel %vm444, 1, 0
        %v477 = vsel %vm445, 1, 0
        %v478 = vsel %vm446, 1, 0
        %v479 = vsel %vm447, 1, 0
        %v480 = vsel %vm448, 1, 0
        %v481 = vsel %vm449, 1, 0
        %v482 = vsel %vm450, 1, 0
        %v483 = vsel %vm451, 1, 0
        %v484 = vsel %vm452, 1, 0
        %v485 = vsel %vm453, 1, 0
        %v486 = vsel %vm454, 1, 0
        %v487 = vsel %vm455, 1, 0
        %v488 = vsel %vm456, 1, 0
        %v489 = vsel %vm457, 1, 0
        %v490 = vsel %vm458, 1, 0
        %v491 = vsel %vm459, 1, 0
        %v492 = vsel %vm460, 1, 0
        %v493 = vsel %vm461, 1, 0
        %v494 = vsel %vm462, 1, 0
        %v495 = vsel %vm463, 1, 0
        %v496 = vcvt.s32.f32 %v464
        %v497 = vcvt.s32.f32 %v465
        %v498 = vcvt.s32.f32 %v466
        %v499 = vcvt.s32.f32 %v467
        %v500 = vcvt.s32.f32 %v468
        %v501 = vcvt.s32.f32 %v469
        %v502 = vcvt.s32.f32 %v470
        %v503 = vcvt.s32.f32 %v471
        %v504 = vcvt.s32.f32 %v472
        %v505 = vcvt.s32.f32 %v473
        %v506 = vcvt.s32.f32 %v474
        %v507 = vcvt.s32.f32 %v475
        %v508 = vcvt.s32.f32 %v476
        %v509 = vcvt.s32.f32 %v477
        %v510 = vcvt.s32.f32 %v478
        %v511 = vcvt.s32.f32 %v479
        %v512 = vcvt.s32.f32 %v480
        %v513 = vcvt.s32.f32 %v481
        %v514 = vcvt.s32.f32 %v482
        %v515 = vcvt.s32.f32 %v483
        %v516 = vcvt.s32.f32 %v484
        %v517 = vcvt.s32.f32 %v485
        %v518 = vcvt.s32.f32 %v486
        %v519 = vcvt.s32.f32 %v487
        %v520 = vcvt.s32.f32 %v488
        %v521 = vcvt.s32.f32 %v489
        %v522 = vcvt.s32.f32 %v490
        %v523 = vcvt.s32.f32 %v491
        %v524 = vcvt.s32.f32 %v492
        %v525 = vcvt.s32.f32 %v493
        %v526 = vcvt.s32.f32 %v494
        %v527 = vcvt.s32.f32 %v495
        %v528 = vpack.c.bf16 %v498, %v496
        %v529 = vpack.c.bf16 %v499, %v497
        %v530 = vpack.c.bf16 %v502, %v500
        %v531 = vpack.c.bf16 %v503, %v501
        %v532 = vpack.c.bf16 %v506, %v504
        %v533 = vpack.c.bf16 %v507, %v505
        %v534 = vpack.c.bf16 %v510, %v508
        %v535 = vpack.c.bf16 %v511, %v509
        %v536 = vpack.c.bf16 %v514, %v512
        %v537 = vpack.c.bf16 %v515, %v513
        %v538 = vpack.c.bf16 %v518, %v516
        %v539 = vpack.c.bf16 %v519, %v517
        %v540 = vpack.c.bf16 %v522, %v520
        %v541 = vpack.c.bf16 %v523, %v521
        %v542 = vpack.c.bf16 %v526, %v524
        %v543 = vpack.c.bf16 %v527, %v525
        %v544 = vld [vmem:[#allocation7] sm:$0xf]
        %v545 = vld [vmem:[#allocation7 + $0x4] sm:$0xf]
        %v546 = vld [vmem:[#allocation7 + $0x8] sm:$0xf]
        %v547 = vld [vmem:[#allocation7 + $0xc] sm:$0xf]
        %v552 = vunpack.c.l.b16 %v544
        %v553 = vunpack.c.l.b16 %v545
        %v554 = vunpack.c.l.b16 %v546
        %v555 = vunpack.c.l.b16 %v547
        %v556 = vpack.c.b16 %v553, %v552
        %v557 = vpack.c.b16 %v555, %v554
        %560 = vmatprep.subr.bf16.mxu0 %v409
        %561 = vmatpush1.bf16.msra.mxu0 %v408
        %562 = vmatprep.subr.bf16.mxu0 %v411
        %563 = vmatpush1.bf16.msra.mxu0 %v410
        %564 = vmatprep.subr.bf16.mxu0 %v413
        %565 = vmatpush1.bf16.msra.mxu0 %v412
        %566 = vmatprep.subr.bf16.mxu0 %v415
        %567 = vmatpush1.bf16.msra.mxu0 %v414
        %568 = vmatprep.subr.bf16.mxu0 %v417
        %569 = vmatpush1.bf16.msra.mxu0 %v416
        %570 = vmatprep.subr.bf16.mxu0 %v419
        %571 = vmatpush1.bf16.msra.mxu0 %v418
        %572 = vmatprep.subr.bf16.mxu0 %v421
        %573 = vmatpush1.bf16.msra.mxu0 %v420
        %574 = vmatprep.subr.bf16.mxu0 %v423
        %575 = vmatpush1.bf16.msra.mxu0 %v422
        %576 = vmatprep.subr.bf16.mxu0 0
        %577 = vmatpush1.bf16.msra.mxu0 0
        %578 = vmatprep.subr.bf16.mxu0 0
        %579 = vmatpush1.bf16.msra.mxu0 0
        %580 = vmatprep.subr.bf16.mxu0 0
        %581 = vmatpush1.bf16.msra.mxu0 0
        %582 = vmatprep.subr.bf16.mxu0 0
        %583 = vmatpush1.bf16.msra.mxu0 0
        %584 = vmatprep.subr.bf16.mxu0 0
        %585 = vmatpush1.bf16.msra.mxu0 0
        %586 = vmatprep.subr.bf16.mxu0 0
        %587 = vmatpush1.bf16.msra.mxu0 0
        %588 = vmatprep.subr.bf16.mxu0 0
        %589 = vmatpush1.bf16.msra.mxu0 0
        %590 = vmatprep.subr.bf16.mxu0 0
        %591 = vmatpush1.bf16.msra.mxu0 0
        %592 = vmatprep.mubr.bf16.mxu0 0
        %593 = vmatmul.mubr.bf16.gmra.mrb[0].mxu0 %v556
        %v594 = vpop.f32.mrb[0].mxu0
        %v595 = vadd.f32 0.0, %v594
        %v596 = vpop.f32.mrb[0].mxu0
        %v597 = vadd.f32 0.0, %v596
        %v598 = vpop.f32.mrb[0].mxu0
        %v599 = vadd.f32 0.0, %v598
        %v600 = vpop.f32.mrb[0].mxu0
        %v601 = vadd.f32 0.0, %v600
        %602 = vmatprep.mubr.bf16.mxu0 0
        %603 = vmatmul.mubr.bf16.gmra.mrb[0].mxu0 %v557
        %v604 = vpop.f32.mrb[0].mxu0
        %v605 = vadd.f32 0.0, %v604
        %v606 = vpop.f32.mrb[0].mxu0
        %v607 = vadd.f32 0.0, %v606
        %v608 = vpop.f32.mrb[0].mxu0
        %v609 = vadd.f32 0.0, %v608
        %v610 = vpop.f32.mrb[0].mxu0
        %v611 = vadd.f32 0.0, %v610
        %612 = vdwg.mxu0
        %v613 = vld [vmem:[#allocation8] sm:$0xf]
        %v614 = vld [vmem:[#allocation8 + $0x4] sm:$0xf]
        %v615 = vld [vmem:[#allocation8 + $0x8] sm:$0xf]
        %v616 = vld [vmem:[#allocation8 + $0xc] sm:$0xf]
        %v621 = vunpack.c.l.b16 %v613
        %v622 = vunpack.c.l.b16 %v614
        %v623 = vunpack.c.l.b16 %v615
        %v624 = vunpack.c.l.b16 %v616
        %v625 = vpack.c.b16 %v622, %v621
        %v626 = vpack.c.b16 %v624, %v623
        %629 = vmatprep.subr.bf16.mxu0 %v529
        %630 = vmatpush1.bf16.msra.mxu0 %v528
        %631 = vmatprep.subr.bf16.mxu0 %v531
        %632 = vmatpush1.bf16.msra.mxu0 %v530
        %633 = vmatprep.subr.bf16.mxu0 %v533
        %634 = vmatpush1.bf16.msra.mxu0 %v532
        %635 = vmatprep.subr.bf16.mxu0 %v535
        %636 = vmatpush1.bf16.msra.mxu0 %v534
        %637 = vmatprep.subr.bf16.mxu0 %v537
        %638 = vmatpush1.bf16.msra.mxu0 %v536
        %639 = vmatprep.subr.bf16.mxu0 %v539
        %640 = vmatpush1.bf16.msra.mxu0 %v538
        %641 = vmatprep.subr.bf16.mxu0 %v541
        %642 = vmatpush1.bf16.msra.mxu0 %v540
        %643 = vmatprep.subr.bf16.mxu0 %v543
        %644 = vmatpush1.bf16.msra.mxu0 %v542
        %645 = vmatprep.subr.bf16.mxu0 0
        %646 = vmatpush1.bf16.msra.mxu0 0
        %647 = vmatprep.subr.bf16.mxu0 0
        %648 = vmatpush1.bf16.msra.mxu0 0
        %649 = vmatprep.subr.bf16.mxu0 0
        %650 = vmatpush1.bf16.msra.mxu0 0
        %651 = vmatprep.subr.bf16.mxu0 0
        %652 = vmatpush1.bf16.msra.mxu0 0
        %653 = vmatprep.subr.bf16.mxu0 0
        %654 = vmatpush1.bf16.msra.mxu0 0
        %655 = vmatprep.subr.bf16.mxu0 0
        %656 = vmatpush1.bf16.msra.mxu0 0
        %657 = vmatprep.subr.bf16.mxu0 0
        %658 = vmatpush1.bf16.msra.mxu0 0
        %659 = vmatprep.subr.bf16.mxu0 0
        %660 = vmatpush1.bf16.msra.mxu0 0
        %661 = vmatprep.mubr.bf16.mxu0 0
        %662 = vmatmul.mubr.bf16.gmra.mrb[0].mxu0 %v625
        %v663 = vpop.f32.mrb[0].mxu0
        %v664 = vadd.f32 0.0, %v663
        %v665 = vpop.f32.mrb[0].mxu0
        %v666 = vadd.f32 0.0, %v665
        %v667 = vpop.f32.mrb[0].mxu0
        %v668 = vadd.f32 0.0, %v667
        %v669 = vpop.f32.mrb[0].mxu0
        %v670 = vadd.f32 0.0, %v669
        %671 = vmatprep.mubr.bf16.mxu0 0
        %672 = vmatmul.mubr.bf16.gmra.mrb[0].mxu0 %v626
        %v673 = vpop.f32.mrb[0].mxu0
        %v674 = vadd.f32 0.0, %v673
        %v675 = vpop.f32.mrb[0].mxu0
        %v676 = vadd.f32 0.0, %v675
        %v677 = vpop.f32.mrb[0].mxu0
        %v678 = vadd.f32 0.0, %v677
        %v679 = vpop.f32.mrb[0].mxu0
        %v680 = vadd.f32 0.0, %v679
        %681 = vdwg.mxu0
        %v682 = vmul.f32 %v595, %v664
        %v683 = vmul.f32 %v597, %v666
        %v684 = vmul.f32 %v599, %v668
        %v685 = vmul.f32 %v601, %v670
        %v686 = vmul.f32 %v605, %v674
        %v687 = vmul.f32 %v607, %v676
        %v688 = vmul.f32 %v609, %v678
        %v689 = vmul.f32 %v611, %v680
        %v690 = vadd.f32 %v682, %v684
        %v691 = vadd.f32 %v690, %v686
        %v692 = vadd.f32 %v691, %v688
        %v693 = vrot.slane %v692, 4
        %v694 = vadd.f32 %v692, %v693
        %v695 = vrot.slane %v694, 2
        %v696 = vadd.f32 %v694, %v695
        %v697 = vrot.slane %v696, 1
        %v698 = vadd.f32 %v696, %v697
        %v699 = vadd.f32 %v683, %v685
        %v700 = vadd.f32 %v699, %v687
        %v701 = vadd.f32 %v700, %v689
        %v702 = vrot.slane %v701, 4
        %v703 = vadd.f32 %v701, %v702
        %v704 = vrot.slane %v703, 2
        %v705 = vadd.f32 %v703, %v704
        %v706 = vrot.slane %v705, 1
        %v707 = vadd.f32 %v705, %v706
        %v708 = vsub.f32 0.0, %v698
        %v709 = vsub.f32 0.0, %v707
        %v710 = vmul.f32 %v708, 1.442695
        %v711 = vpow.pop %v710
        %v712 = vmul.f32 %v709, 1.442695
        %v713 = vpow.pop %v712
        %v714 = vadd.f32 %v711, 1.0
        %v715 = vadd.f32 %v713, 1.0
        %v716 = vrcp.pop %v714
        %v717 = vrcp.pop %v715
        %v720 = vcombine.low %v716, %v717
        %v722 = vunpack.c.l.s4 1966171168
        %v723 = vunpack.c.0.s8 %v722
        %v724 = vlaneseq
        %v725 = vshrl.u32 %v724, 7
        %v726 = vsub.s32 %v723, %v725
        %v727 = vrot.slane %v720, %v726
        %v729 = vunpack.c.l.s4 1966171168
        %v730 = vunpack.c.0.s8 %v729
        %v731 = vlaneseq
        %v732 = vshrl.u32 %v731, 7
        %v733 = vsub.s32 %v730, %v732
        %v734 = vrot.slane %v727, %v733
        %v736 = vlaneseq
        %vm737 = vcmp.ge.s32.totalorder %v736, 0
        %vm738 = vcmp.lt.s32.totalorder %v736, 256
        %vm739 = vmand %vm737, %vm738
        %740 = vst.msk [vmem:[%s280] sm:$0x3] %vm739, %v734
        %s741 = sand.u32 %s127, 1
        %s742 = scalar_lea.sflag [#allocation4], %s741
        %s743 = sand.u32 %s127, 1
        %s744 = smul.addr %s743, 2
        %s745 = scalar_lea.vmem [#allocation10], %s744
        // Predicated region
        $region53: #{tpu_custom_call.1} parent=35 // pred_check
          %p746 = pneg %p137
        $region54: #{tpu_custom_call.1} parent=35 // pred_check_branch
          %748 = sbr.rel (%p746) target = $region56
        $region55: #{tpu_custom_call.1} parent=35 // pred_region
          %s749 = smul.u32 2, %s25
          %s751 = ssub.s32 32, 32
          %752 = vsyncadd %s742, %s751
          %s753 = smul.addr %s749, 16
          %s754 = scalar_lea.hbm %s4, %s753
          %s756 = sshll.u32 %s745, 4
          %s757 = int_to_ptr.vmem [resolvable:$true] %s756
          %759 = dma.vmem_to_hbm [thread:$0]  %s757, 32, %s754, %s742
        $region56: #{tpu_custom_call.1} parent=35 // pred_fallthru
          _
      $region36: #{tpu_custom_call.1} parent=5 // pred_fallthru
        _
      %p760 = scmp.le.s32.totalorder 2, %s20
      // Predicated region
      $region57: #{tpu_custom_call.1} parent=5 // pred_check
        %p761 = pneg %p760
      $region58: #{tpu_custom_call.1} parent=5 // pred_check_branch
        %763 = sbr.rel (%p761) target = $region60
      $region59: #{tpu_custom_call.1} parent=5 // pred_region
        %s764 = ssub.s32 %s20, 2
        // Predicated region
        $region61: #{tpu_custom_call.1} parent=59 // pred_check
          %p765 = pneg %p143
        $region62: #{tpu_custom_call.1} parent=59 // pred_check_branch
          %767 = sbr.rel (%p765) target = $region64
        $region63: #{tpu_custom_call.1} parent=59 // pred_region
          %s768 = sand.u32 %s128, 1
          %s769 = scalar_lea.sflag [#allocation4], %s768
          %s770 = sand.u32 %s128, 1
          %s771 = smul.addr %s770, 2
          %s772 = scalar_lea.vmem [#allocation10], %s771
          %773 = dma.done %s769, 32
        $region64: #{tpu_custom_call.1} parent=59 // pred_fallthru
          _
      $region60: #{tpu_custom_call.1} parent=5 // pred_fallthru
        _
    $region6: #{tpu_custom_call.1} parent=1 // loop_footer
      %s24 = sadd.s32 1, %s20
    $region7: #{tpu_custom_call.1} parent=1 // loop_footer_branch
      %19 = sbr.rel target = $region3
    $region8: #{tpu_custom_call.1} parent=1 // loop_exit
      _
    %774 = vsyncpa [#allocation3], 1
    %s775 = scalar_lea.sflag [#allocation3], 1
    %776 = vsyncpa %s775, 1
    %777 = vsyncpa [#allocation6], 1
    %s778 = scalar_lea.sflag [#allocation6], 1
    %779 = vsyncpa %s778, 1
    %780 = vsyncpa [#allocation9], 1
    %781 = vsyncpa [#allocation4], 1
    %s782 = scalar_lea.sflag [#allocation4], 1
    %783 = vsyncpa %s782, 1

// kernel: tpu_custom_call.1
$region0: #{tpu_custom_call.1}
  #allocation0 [shape = 'u32[]', space=smem, size = 0x4, offset = 0x4, fixed_abs, tag = 'smem constant byte address 0x4 - core index']
  #allocation1 [shape = 'u32[144,128]{1,0:T(1,128)}', space=vmem, size = 0x12000, scoped, tag = 'internal scratch']
  %s0 = inlined_call_operand.hbm [shape: s32[1,512], index: 0, kind: input, shape index: {}]
  %s1 = inlined_call_operand.hbm [shape: s32[1,512], index: 1, kind: input, shape index: {}]
  %s2 = inlined_call_operand.hbm [shape: bf16[32,128], index: 2, kind: input, shape index: {}]
  %s3 = inlined_call_operand.hbm [shape: bf16[32,128], index: 3, kind: input, shape index: {}]
  %s4 = inlined_call_operand.hbm [shape: f32[1,512], index: 4, kind: output, shape index: {}]
  %s5 = sld [smem:[#allocation0]]
  $region65: #{tpu_custom_call.1} parent=0
    _
  %s7 = ssub.s32 1, %s5
  %s8 = scalar_select 0, %s7, %s5
  $region1: #{tpu_custom_call.1} parent=0
    #allocation2 [shape = 'u8[2048]{0}', space=vmem, size = 0x800, scoped, tag = 'input window, operand 0']
    #allocation3 [shape = 's32[2]{0}', space=sflag, size = 0x8, scoped, tag = 'scoped memory for tpu_custom_call.1']
    #allocation4 [shape = 's32[2]{0}', space=sflag, size = 0x8, scoped, tag = 'scoped memory for tpu_custom_call.1']
    #allocation5 [shape = 'u8[2048]{0}', space=vmem, size = 0x800, scoped, tag = 'input window, operand 1']
    #allocation6 [shape = 's32[2]{0}', space=sflag, size = 0x8, scoped, tag = 'scoped memory for tpu_custom_call.1']
    #allocation7 [shape = 'u8[8192]{0}', space=vmem, size = 0x2000, scoped, tag = 'input window, operand 2, single buffered']
    #allocation8 [shape = 'u8[8192]{0}', space=vmem, size = 0x2000, scoped, tag = 'input window, operand 3, single buffered']
    #allocation9 [shape = 's32[1]{0}', space=sflag, size = 0x4, scoped, tag = 'scoped memory for tpu_custom_call.1']
    #allocation10 [shape = 'u8[2048]{0}', space=vmem, size = 0x800, scoped, tag = 'output window, operand 0']
    %9 = vsyncpa [#allocation3], 0
    %s10 = scalar_lea.sflag [#allocation3], 1
    %11 = vsyncpa %s10, 0
    %12 = vsyncpa [#allocation6], 0
    %s13 = scalar_lea.sflag [#allocation6], 1
    %14 = vsyncpa %s13, 0
    %15 = vsyncpa [#allocation9], 0
    %16 = vsyncpa [#allocation4], 0
    %s17 = scalar_lea.sflag [#allocation4], 1
    %18 = vsyncpa %s17, 0
    loop: start=0, step=1, limit=4
    $region2: #{tpu_custom_call.1} parent=1 // loop_pre_header
      _
    $region3: #{tpu_custom_call.1} parent=1 // loop_header
      %s20 = sphi 0, %s24
      %p21 = scmp.ge.s32.totalorder %s20, 4
      %s30 = sphi 0, %s32
      %s33 = sphi 0, %s30
      %s34 = sphi 0, %s33
      %s50 = sphi 0, %s34
      %s56 = sphi 0, %s58
      %s59 = sphi 0, %s56
      %s60 = sphi 0, %s59
      %s76 = sphi 0, %s60
      %s80 = sphi 0, %s80
      %s82 = sphi 0, %s80
      %s83 = sphi 0, %s82
      %s97 = sphi 0, %s83
      %s101 = sphi 0, %s101
      %s103 = sphi 0, %s101
      %s104 = sphi 0, %s103
      %s118 = sphi 0, %s104
      %s124 = sphi 0, %s126
      %s127 = sphi 0, %s124
      %s128 = sphi 0, %s127
      %s144 = sphi 0, %s128
    $region4: #{tpu_custom_call.1} parent=1 // loop_header_branch
      %23 = sbr.rel (%p21) target = $region8
    $region5: #{tpu_custom_call.1} parent=1 // loop_body
      %s25 = ssub.s32 %s20, 1
      %s26 = ssub.s32 %s20, 2
      %s27 = sadd.s32 %s20, 1
      %s28 = ssub.s32 %s20, %s27
      %p29 = scmp.eq.s32.totalorder %s28, 0
      %s31 = sadd.s32 %s30, 1
      %s32 = scalar_select %p29, %s30, %s31
      %p35 = pneg %p29
      %p36 = scmp.eq.s32.totalorder %s20, 1
      %p37 = por %p35, %p36
      %p38 = scmp.ne.s32.totalorder %s30, %s33
      %p39 = scmp.eq.s32.totalorder %s20, 0
      %p40 = por %p38, %p39
      %p41 = scmp.ne.s32.totalorder %s30, %s33
      %p42 = scmp.eq.s32.totalorder %s25, 1
      %p43 = por %p41, %p42
      %p44 = scmp.ne.s32.totalorder %s33, %s34
      %p45 = scmp.eq.s32.totalorder %s25, 0
      %p46 = por %p44, %p45
      %p47 = scmp.ne.s32.totalorder %s33, %s34
      %p48 = scmp.eq.s32.totalorder %s26, 1
      %p49 = por %p47, %p48
      %p51 = scmp.ne.s32.totalorder %s34, %s50
      %p52 = scmp.eq.s32.totalorder %s26, 0
      %p53 = por %p51, %p52
      %s54 = ssub.s32 %s20, %s27
      %p55 = scmp.eq.s32.totalorder %s54, 0
      %s57 = sadd.s32 %s56, 1
      %s58 = scalar_select %p55, %s56, %s57
      %p61 = pneg %p55
      %p62 = scmp.eq.s32.totalorder %s20, 1
      %p63 = por %p61, %p62
      %p64 = scmp.ne.s32.totalorder %s56, %s59
      %p65 = scmp.eq.s32.totalorder %s20, 0
      %p66 = por %p64, %p65
      %p67 = scmp.ne.s32.totalorder %s56, %s59
      %p68 = scmp.eq.s32.totalorder %s25, 1
      %p69 = por %p67, %p68
      %p70 = scmp.ne.s32.totalorder %s59, %s60
      %p71 = scmp.eq.s32.totalorder %s25, 0
      %p72 = por %p70, %p71
      %p73 = scmp.ne.s32.totalorder %s59, %s60
      %p74 = scmp.eq.s32.totalorder %s26, 1
      %p75 = por %p73, %p74
      %p77 = scmp.ne.s32.totalorder %s60, %s76
      %p78 = scmp.eq.s32.totalorder %s26, 0
      %p79 = por %p77, %p78
      %s81 = sadd.s32 %s80, 1
      %p84 = scmp.eq.s32.totalorder %s20, 1
      %p85 = scmp.ne.s32.totalorder %s80, %s82
      %p86 = scmp.eq.s32.totalorder %s20, 0
      %p87 = por %p85, %p86
      %p88 = scmp.ne.s32.totalorder %s80, %s82
      %p89 = scmp.eq.s32.totalorder %s25, 1
      %p90 = por %p88, %p89
      %p91 = scmp.ne.s32.totalorder %s82, %s83
      %p92 = scmp.eq.s32.totalorder %s25, 0
      %p93 = por %p91, %p92
      %p94 = scmp.ne.s32.totalorder %s82, %s83
      %p95 = scmp.eq.s32.totalorder %s26, 1
      %p96 = por %p94, %p95
      %p98 = scmp.ne.s32.totalorder %s83, %s97
      %p99 = scmp.eq.s32.totalorder %s26, 0
      %p100 = por %p98, %p99
      %s102 = sadd.s32 %s101, 1
      %p105 = scmp.eq.s32.totalorder %s20, 1
      %p106 = scmp.ne.s32.totalorder %s101, %s103
      %p107 = scmp.eq.s32.totalorder %s20, 0
      %p108 = por %p106, %p107
      %p109 = scmp.ne.s32.totalorder %s101, %s103
      %p110 = scmp.eq.s32.totalorder %s25, 1
      %p111 = por %p109, %p110
      %p112 = scmp.ne.s32.totalorder %s103, %s104
      %p113 = scmp.eq.s32.totalorder %s25, 0
      %p114 = por %p112, %p113
      %p115 = scmp.ne.s32.totalorder %s103, %s104
      %p116 = scmp.eq.s32.totalorder %s26, 1
      %p117 = por %p115, %p116
      %p119 = scmp.ne.s32.totalorder %s104, %s118
      %p120 = scmp.eq.s32.totalorder %s26, 0
      %p121 = por %p119, %p120
      %s122 = ssub.s32 %s20, %s27
      %p123 = scmp.eq.s32.totalorder %s122, 0
      %s125 = sadd.s32 %s124, 1
      %s126 = scalar_select %p123, %s124, %s125
      %p129 = pneg %p123
      %p130 = scmp.eq.s32.totalorder %s20, 1
      %p131 = por %p129, %p130
      %p132 = scmp.ne.s32.totalorder %s124, %s127
      %p133 = scmp.eq.s32.totalorder %s20, 0
      %p134 = por %p132, %p133
      %p135 = scmp.ne.s32.totalorder %s124, %s127
      %p136 = scmp.eq.s32.totalorder %s25, 1
      %p137 = por %p135, %p136
      %p138 = scmp.ne.s32.totalorder %s127, %s128
      %p139 = scmp.eq.s32.totalorder %s25, 0
      %p140 = por %p138, %p139
      %p141 = scmp.ne.s32.totalorder %s127, %s128
      %p142 = scmp.eq.s32.totalorder %s26, 1
      %p143 = por %p141, %p142
      %p145 = scmp.ne.s32.totalorder %s128, %s144
      %p146 = scmp.eq.s32.totalorder %s26, 0
      %p147 = por %p145, %p146
      %p148 = scmp.le.s32.totalorder 1, %s20
      %p149 = scmp.lt.s32.totalorder %s20, 3
      %p150 = pnand %p148, %p149
      %p151 = pneg %p150
      // Predicated region
      $region9: #{tpu_custom_call.1} parent=5 // pred_check
        _
      $region10: #{tpu_custom_call.1} parent=5 // pred_check_branch
        %153 = sbr.rel (%p150) target = $region12
      $region11: #{tpu_custom_call.1} parent=5 // pred_region
        %s154 = ssub.s32 %s20, 1
        // Predicated region
        $region13: #{tpu_custom_call.1} parent=11 // pred_check
          %p155 = pneg %p93
        $region14: #{tpu_custom_call.1} parent=11 // pred_check_branch
          %157 = sbr.rel (%p155) target = $region16
        $region15: #{tpu_custom_call.1} parent=11 // pred_region
          %s159 = ssub.s32 256, 256
          %160 = vsyncadd [#allocation6], %s159
          %s161 = sshll.u32 [#allocation7], 4
          %s162 = int_to_ptr.vmem [resolvable:$true] %s161
          %167 = dma.hbm_to_vmem [thread:$0]  %s2, 256, %s162, [#allocation6], 64, 64, 4
        $region16: #{tpu_custom_call.1} parent=11 // pred_fallthru
          _
        // Predicated region
        $region17: #{tpu_custom_call.1} parent=11 // pred_check
          %p168 = pneg %p114
        $region18: #{tpu_custom_call.1} parent=11 // pred_check_branch
          %170 = sbr.rel (%p168) target = $region20
        $region19: #{tpu_custom_call.1} parent=11 // pred_region
          %s172 = ssub.s32 256, 256
          %173 = vsyncadd [#allocation9], %s172
          %s174 = sshll.u32 [#allocation8], 4
          %s175 = int_to_ptr.vmem [resolvable:$true] %s174
          %180 = dma.hbm_to_vmem [thread:$0]  %s3, 256, %s175, [#allocation9], 64, 64, 4
        $region20: #{tpu_custom_call.1} parent=11 // pred_fallthru
          _
      $region12: #{tpu_custom_call.1} parent=5 // pred_fallthru
        _
      %p181 = scmp.lt.s32.totalorder %s20, 2
      // Predicated region
      $region21: #{tpu_custom_call.1} parent=5 // pred_check
        %p182 = pneg %p181
      $region22: #{tpu_custom_call.1} parent=5 // pred_check_branch
        %184 = sbr.rel (%p182) target = $region24
      $region23: #{tpu_custom_call.1} parent=5 // pred_region
        // Predicated region
        $region25: #{tpu_custom_call.1} parent=23 // pred_check
          %p185 = pneg %p40
        $region26: #{tpu_custom_call.1} parent=23 // pred_check_branch
          %187 = sbr.rel (%p185) target = $region28
        $region27: #{tpu_custom_call.1} parent=23 // pred_region
          %s188 = sand.u32 %s30, 1
          %s189 = scalar_lea.sflag [#allocation3], %s188
          %s190 = sand.u32 %s30, 1
          %s191 = smul.addr %s190, 2
          %s192 = scalar_lea.vmem [#allocation2], %s191
          %s193 = smul.u32 2, %s20
          %s195 = ssub.s32 32, 32
          %196 = vsyncadd %s189, %s195
          %s197 = smul.addr %s193, 16
          %s198 = scalar_lea.hbm %s0, %s197
          %s200 = sshll.u32 %s192, 4
          %s201 = int_to_ptr.vmem [resolvable:$true] %s200
          %203 = dma.hbm_to_vmem [thread:$0]  %s198, 32, %s201, %s189
        $region28: #{tpu_custom_call.1} parent=23 // pred_fallthru
          _
        // Predicated region
        $region29: #{tpu_custom_call.1} parent=23 // pred_check
          %p204 = pneg %p66
        $region30: #{tpu_custom_call.1} parent=23 // pred_check_branch
          %206 = sbr.rel (%p204) target = $region32
        $region31: #{tpu_custom_call.1} parent=23 // pred_region
          %s207 = sand.u32 %s20, 1
          %s208 = scalar_lea.sflag [#allocation6], %s207
          %s209 = sand.u32 %s56, 1
          %s210 = smul.addr %s209, 2
          %s211 = scalar_lea.vmem [#allocation5], %s210
          %s212 = smul.u32 2, %s20
          %s214 = ssub.s32 32, 32
          %215 = vsyncadd %s208, %s214
          %s216 = smul.addr %s212, 16
          %s217 = scalar_lea.hbm %s1, %s216
          %s219 = sshll.u32 %s211, 4
          %s220 = int_to_ptr.vmem [resolvable:$true] %s219
          %222 = dma.hbm_to_vmem [thread:$0]  %s217, 32, %s220, %s208
        $region32: #{tpu_custom_call.1} parent=23 // pred_fallthru
          _
      $region24: #{tpu_custom_call.1} parent=5 // pred_fallthru
        _
      %p223 = scmp.le.s32.totalorder 1, %s20
      %p224 = scmp.lt.s32.totalorder %s20, 3
      %p225 = pnand %p223, %p224
      %p226 = pneg %p225
      // Predicated region
      $region33: #{tpu_custom_call.1} parent=5 // pred_check
        _
      $region34: #{tpu_custom_call.1} parent=5 // pred_check_branch
        %228 = sbr.rel (%p225) target = $region36
      $region35: #{tpu_custom_call.1} parent=5 // pred_region
        %s229 = ssub.s32 %s20, 1
        %s230 = sand.u32 %s33, 1
        %s231 = scalar_lea.sflag [#allocation3], %s230
        %s232 = sand.u32 %s33, 1
        %s233 = smul.addr %s232, 2
        %s234 = scalar_lea.vmem [#allocation2], %s233
        // Predicated region
        $region37: #{tpu_custom_call.1} parent=35 // pred_check
          %p235 = pneg %p46
        $region38: #{tpu_custom_call.1} parent=35 // pred_check_branch
          %237 = sbr.rel (%p235) target = $region40
        $region39: #{tpu_custom_call.1} parent=35 // pred_region
          %238 = dma.done %s231, 32
        $region40: #{tpu_custom_call.1} parent=35 // pred_fallthru
          _
        %s239 = sand.u32 %s25, 1
        %s240 = scalar_lea.sflag [#allocation6], %s239
        %s241 = sand.u32 %s59, 1
        %s242 = smul.addr %s241, 2
        %s243 = scalar_lea.vmem [#allocation5], %s242
        // Predicated region
        $region41: #{tpu_custom_call.1} parent=35 // pred_check
          %p244 = pneg %p72
        $region42: #{tpu_custom_call.1} parent=35 // pred_check_branch
          %246 = sbr.rel (%p244) target = $region44
        $region43: #{tpu_custom_call.1} parent=35 // pred_region
          %247 = dma.done %s240, 32
        $region44: #{tpu_custom_call.1} parent=35 // pred_fallthru
          _
        // Predicated region
        $region45: #{tpu_custom_call.1} parent=35 // pred_check
          %p248 = pneg %p93
        $region46: #{tpu_custom_call.1} parent=35 // pred_check_branch
          %250 = sbr.rel (%p248) target = $region48
        $region47: #{tpu_custom_call.1} parent=35 // pred_region
          %251 = dma.done [#allocation6], 256
        $region48: #{tpu_custom_call.1} parent=35 // pred_fallthru
          _
        // Predicated region
        $region49: #{tpu_custom_call.1} parent=35 // pred_check
          %p252 = pneg %p114
        $region50: #{tpu_custom_call.1} parent=35 // pred_check_branch
          %254 = sbr.rel (%p252) target = $region52
        $region51: #{tpu_custom_call.1} parent=35 // pred_region
          %255 = dma.done [#allocation9], 256
        $region52: #{tpu_custom_call.1} parent=35 // pred_fallthru
          _
        %s256 = sand.u32 %s33, 1
        %s257 = scalar_lea.sflag [#allocation3], %s256
        %s258 = sand.u32 %s33, 1
        %s259 = smul.addr %s258, 2
        %s260 = scalar_lea.vmem [#allocation2], %s259
        %p261 = pneg %p46
        %p262 = pneg %p43
        %s263 = sand.u32 %s25, 1
        %s264 = scalar_lea.sflag [#allocation6], %s263
        %s265 = sand.u32 %s59, 1
        %s266 = smul.addr %s265, 2
        %s267 = scalar_lea.vmem [#allocation5], %s266
        %p268 = pneg %p72
        %p269 = pneg %p69
        %p270 = pneg %p93
        %p271 = pneg %p90
        %p272 = pneg %p114
        %p273 = pneg %p111
        %p274 = pneg %p140
        %p275 = pneg %p137
        %s276 = sand.u32 %s127, 1
        %s277 = scalar_lea.sflag [#allocation4], %s276
        %s278 = sand.u32 %s127, 1
        %s279 = smul.addr %s278, 2
        %s280 = scalar_lea.vmem [#allocation10], %s279
        %s281 = smul.u32 2, %s25
        %s282 = smul.u32 2, %s25
        %s283 = smul.u32 2, %s25
        %v285 = vld [vmem:[%s234] sm:$0x3]
        %v286 = vld [vmem:[%s243] sm:$0x3]
        %v287 = vlaneseq
        %v288 = vshrl.u32 %v287, 7
        %v289 = vadd.s32 %v288, 8
        %v290 = vadd.s32 %v288, 16
        %v291 = vadd.s32 %v288, 24
        %v292 = vadd.s32 %v288, 32
        %v293 = vadd.s32 %v288, 40
        %v294 = vadd.s32 %v288, 48
        %v295 = vadd.s32 %v288, 56
        %v296 = vadd.s32 %v288, 64
        %v297 = vadd.s32 %v288, 72
        %v298 = vadd.s32 %v288, 80
        %v299 = vadd.s32 %v288, 88
        %v300 = vadd.s32 %v288, 96
        %v301 = vadd.s32 %v288, 104
        %v302 = vadd.s32 %v288, 112
        %v303 = vadd.s32 %v288, 120
        %v304 = vlaneseq
        %v305 = vshrl.u32 %v304, 7
        %v306 = vsub.s32 0, %v305
        %v307 = vrot.slane %v285, %v306
        %v308 = vlaneseq
        %v309 = vshrl.u32 %v308, 7
        %v310 = vsub.s32 1, %v309
        %v311 = vrot.slane %v285, %v310
        %vm312 = vcmp.eq.s32.totalorder %v288, %v307
        %vm313 = vcmp.eq.s32.totalorder %v288, %v311
        %vm314 = vcmp.eq.s32.totalorder %v289, %v307
        %vm315 = vcmp.eq.s32.totalorder %v289, %v311
        %vm316 = vcmp.eq.s32.totalorder %v290, %v307
        %vm317 = vcmp.eq.s32.totalorder %v290, %v311
        %vm318 = vcmp.eq.s32.totalorder %v291, %v307
        %vm319 = vcmp.eq.s32.totalorder %v291, %v311
        %vm320 = vcmp.eq.s32.totalorder %v292, %v307
        %vm321 = vcmp.eq.s32.totalorder %v292, %v311
        %vm322 = vcmp.eq.s32.totalorder %v293, %v307
        %vm323 = vcmp.eq.s32.totalorder %v293, %v311
        %vm324 = vcmp.eq.s32.totalorder %v294, %v307
        %vm325 = vcmp.eq.s32.totalorder %v294, %v311
        %vm326 = vcmp.eq.s32.totalorder %v295, %v307
        %vm327 = vcmp.eq.s32.totalorder %v295, %v311
        %vm328 = vcmp.eq.s32.totalorder %v296, %v307
        %vm329 = vcmp.eq.s32.totalorder %v296, %v311
        %vm330 = vcmp.eq.s32.totalorder %v297, %v307
        %vm331 = vcmp.eq.s32.totalorder %v297, %v311
        %vm332 = vcmp.eq.s32.totalorder %v298, %v307
        %vm333 = vcmp.eq.s32.totalorder %v298, %v311
        %vm334 = vcmp.eq.s32.totalorder %v299, %v307
        %vm335 = vcmp.eq.s32.totalorder %v299, %v311
        %vm336 = vcmp.eq.s32.totalorder %v300, %v307
        %vm337 = vcmp.eq.s32.totalorder %v300, %v311
        %vm338 = vcmp.eq.s32.totalorder %v301, %v307
        %vm339 = vcmp.eq.s32.totalorder %v301, %v311
        %vm340 = vcmp.eq.s32.totalorder %v302, %v307
        %vm341 = vcmp.eq.s32.totalorder %v302, %v311
        %vm342 = vcmp.eq.s32.totalorder %v303, %v307
        %vm343 = vcmp.eq.s32.totalorder %v303, %v311
        %v344 = vsel %vm312, 1, 0
        %v345 = vsel %vm313, 1, 0
        %v346 = vsel %vm314, 1, 0
        %v347 = vsel %vm315, 1, 0
        %v348 = vsel %vm316, 1, 0
        %v349 = vsel %vm317, 1, 0
        %v350 = vsel %vm318, 1, 0
        %v351 = vsel %vm319, 1, 0
        %v352 = vsel %vm320, 1, 0
        %v353 = vsel %vm321, 1, 0
        %v354 = vsel %vm322, 1, 0
        %v355 = vsel %vm323, 1, 0
        %v356 = vsel %vm324, 1, 0
        %v357 = vsel %vm325, 1, 0
        %v358 = vsel %vm326, 1, 0
        %v359 = vsel %vm327, 1, 0
        %v360 = vsel %vm328, 1, 0
        %v361 = vsel %vm329, 1, 0
        %v362 = vsel %vm330, 1, 0
        %v363 = vsel %vm331, 1, 0
        %v364 = vsel %vm332, 1, 0
        %v365 = vsel %vm333, 1, 0
        %v366 = vsel %vm334, 1, 0
        %v367 = vsel %vm335, 1, 0
        %v368 = vsel %vm336, 1, 0
        %v369 = vsel %vm337, 1, 0
        %v370 = vsel %vm338, 1, 0
        %v371 = vsel %vm339, 1, 0
        %v372 = vsel %vm340, 1, 0
        %v373 = vsel %vm341, 1, 0
        %v374 = vsel %vm342, 1, 0
        %v375 = vsel %vm343, 1, 0
        %v376 = vcvt.s32.f32 %v344
        %v377 = vcvt.s32.f32 %v345
        %v378 = vcvt.s32.f32 %v346
        %v379 = vcvt.s32.f32 %v347
        %v380 = vcvt.s32.f32 %v348
        %v381 = vcvt.s32.f32 %v349
        %v382 = vcvt.s32.f32 %v350
        %v383 = vcvt.s32.f32 %v351
        %v384 = vcvt.s32.f32 %v352
        %v385 = vcvt.s32.f32 %v353
        %v386 = vcvt.s32.f32 %v354
        %v387 = vcvt.s32.f32 %v355
        %v388 = vcvt.s32.f32 %v356
        %v389 = vcvt.s32.f32 %v357
        %v390 = vcvt.s32.f32 %v358
        %v391 = vcvt.s32.f32 %v359
        %v392 = vcvt.s32.f32 %v360
        %v393 = vcvt.s32.f32 %v361
        %v394 = vcvt.s32.f32 %v362
        %v395 = vcvt.s32.f32 %v363
        %v396 = vcvt.s32.f32 %v364
        %v397 = vcvt.s32.f32 %v365
        %v398 = vcvt.s32.f32 %v366
        %v399 = vcvt.s32.f32 %v367
        %v400 = vcvt.s32.f32 %v368
        %v401 = vcvt.s32.f32 %v369
        %v402 = vcvt.s32.f32 %v370
        %v403 = vcvt.s32.f32 %v371
        %v404 = vcvt.s32.f32 %v372
        %v405 = vcvt.s32.f32 %v373
        %v406 = vcvt.s32.f32 %v374
        %v407 = vcvt.s32.f32 %v375
        %v408 = vpack.c.bf16 %v378, %v376
        %v409 = vpack.c.bf16 %v379, %v377
        %v410 = vpack.c.bf16 %v382, %v380
        %v411 = vpack.c.bf16 %v383, %v381
        %v412 = vpack.c.bf16 %v386, %v384
        %v413 = vpack.c.bf16 %v387, %v385
        %v414 = vpack.c.bf16 %v390, %v388
        %v415 = vpack.c.bf16 %v391, %v389
        %v416 = vpack.c.bf16 %v394, %v392
        %v417 = vpack.c.bf16 %v395, %v393
        %v418 = vpack.c.bf16 %v398, %v396
        %v419 = vpack.c.bf16 %v399, %v397
        %v420 = vpack.c.bf16 %v402, %v400
        %v421 = vpack.c.bf16 %v403, %v401
        %v422 = vpack.c.bf16 %v406, %v404
        %v423 = vpack.c.bf16 %v407, %v405
        %v424 = vlaneseq
        %v425 = vshrl.u32 %v424, 7
        %v426 = vsub.s32 0, %v425
        %v427 = vrot.slane %v286, %v426
        %v428 = vlaneseq
        %v429 = vshrl.u32 %v428, 7
        %v430 = vsub.s32 1, %v429
        %v431 = vrot.slane %v286, %v430
        %vm432 = vcmp.eq.s32.totalorder %v288, %v427
        %vm433 = vcmp.eq.s32.totalorder %v288, %v431
        %vm434 = vcmp.eq.s32.totalorder %v289, %v427
        %vm435 = vcmp.eq.s32.totalorder %v289, %v431
        %vm436 = vcmp.eq.s32.totalorder %v290, %v427
        %vm437 = vcmp.eq.s32.totalorder %v290, %v431
        %vm438 = vcmp.eq.s32.totalorder %v291, %v427
        %vm439 = vcmp.eq.s32.totalorder %v291, %v431
        %vm440 = vcmp.eq.s32.totalorder %v292, %v427
        %vm441 = vcmp.eq.s32.totalorder %v292, %v431
        %vm442 = vcmp.eq.s32.totalorder %v293, %v427
        %vm443 = vcmp.eq.s32.totalorder %v293, %v431
        %vm444 = vcmp.eq.s32.totalorder %v294, %v427
        %vm445 = vcmp.eq.s32.totalorder %v294, %v431
        %vm446 = vcmp.eq.s32.totalorder %v295, %v427
        %vm447 = vcmp.eq.s32.totalorder %v295, %v431
        %vm448 = vcmp.eq.s32.totalorder %v296, %v427
        %vm449 = vcmp.eq.s32.totalorder %v296, %v431
        %vm450 = vcmp.eq.s32.totalorder %v297, %v427
        %vm451 = vcmp.eq.s32.totalorder %v297, %v431
        %vm452 = vcmp.eq.s32.totalorder %v298, %v427
        %vm453 = vcmp.eq.s32.totalorder %v298, %v431
        %vm454 = vcmp.eq.s32.totalorder %v299, %v427
        %vm455 = vcmp.eq.s32.totalorder %v299, %v431
        %vm456 = vcmp.eq.s32.totalorder %v300, %v427
        %vm457 = vcmp.eq.s32.totalorder %v300, %v431
        %vm458 = vcmp.eq.s32.totalorder %v301, %v427
        %vm459 = vcmp.eq.s32.totalorder %v301, %v431
        %vm460 = vcmp.eq.s32.totalorder %v302, %v427
        %vm461 = vcmp.eq.s32.totalorder %v302, %v431
        %vm462 = vcmp.eq.s32.totalorder %v303, %v427
        %vm463 = vcmp.eq.s32.totalorder %v303, %v431
        %v464 = vsel %vm432, 1, 0
        %v465 = vsel %vm433, 1, 0
        %v466 = vsel %vm434, 1, 0
        %v467 = vsel %vm435, 1, 0
        %v468 = vsel %vm436, 1, 0
        %v469 = vsel %vm437, 1, 0
        %v470 = vsel %vm438, 1, 0
        %v471 = vsel %vm439, 1, 0
        %v472 = vsel %vm440, 1, 0
        %v473 = vsel %vm441, 1, 0
        %v474 = vsel %vm442, 1, 0
        %v475 = vsel %vm443, 1, 0
        %v476 = vsel %vm444, 1, 0
        %v477 = vsel %vm445, 1, 0
        %v478 = vsel %vm446, 1, 0
        %v479 = vsel %vm447, 1, 0
        %v480 = vsel %vm448, 1, 0
        %v481 = vsel %vm449, 1, 0
        %v482 = vsel %vm450, 1, 0
        %v483 = vsel %vm451, 1, 0
        %v484 = vsel %vm452, 1, 0
        %v485 = vsel %vm453, 1, 0
        %v486 = vsel %vm454, 1, 0
        %v487 = vsel %vm455, 1, 0
        %v488 = vsel %vm456, 1, 0
        %v489 = vsel %vm457, 1, 0
        %v490 = vsel %vm458, 1, 0
        %v491 = vsel %vm459, 1, 0
        %v492 = vsel %vm460, 1, 0
        %v493 = vsel %vm461, 1, 0
        %v494 = vsel %vm462, 1, 0
        %v495 = vsel %vm463, 1, 0
        %v496 = vcvt.s32.f32 %v464
        %v497 = vcvt.s32.f32 %v465
        %v498 = vcvt.s32.f32 %v466
        %v499 = vcvt.s32.f32 %v467
        %v500 = vcvt.s32.f32 %v468
        %v501 = vcvt.s32.f32 %v469
        %v502 = vcvt.s32.f32 %v470
        %v503 = vcvt.s32.f32 %v471
        %v504 = vcvt.s32.f32 %v472
        %v505 = vcvt.s32.f32 %v473
        %v506 = vcvt.s32.f32 %v474
        %v507 = vcvt.s32.f32 %v475
        %v508 = vcvt.s32.f32 %v476
        %v509 = vcvt.s32.f32 %v477
        %v510 = vcvt.s32.f32 %v478
        %v511 = vcvt.s32.f32 %v479
        %v512 = vcvt.s32.f32 %v480
        %v513 = vcvt.s32.f32 %v481
        %v514 = vcvt.s32.f32 %v482
        %v515 = vcvt.s32.f32 %v483
        %v516 = vcvt.s32.f32 %v484
        %v517 = vcvt.s32.f32 %v485
        %v518 = vcvt.s32.f32 %v486
        %v519 = vcvt.s32.f32 %v487
        %v520 = vcvt.s32.f32 %v488
        %v521 = vcvt.s32.f32 %v489
        %v522 = vcvt.s32.f32 %v490
        %v523 = vcvt.s32.f32 %v491
        %v524 = vcvt.s32.f32 %v492
        %v525 = vcvt.s32.f32 %v493
        %v526 = vcvt.s32.f32 %v494
        %v527 = vcvt.s32.f32 %v495
        %v528 = vpack.c.bf16 %v498, %v496
        %v529 = vpack.c.bf16 %v499, %v497
        %v530 = vpack.c.bf16 %v502, %v500
        %v531 = vpack.c.bf16 %v503, %v501
        %v532 = vpack.c.bf16 %v506, %v504
        %v533 = vpack.c.bf16 %v507, %v505
        %v534 = vpack.c.bf16 %v510, %v508
        %v535 = vpack.c.bf16 %v511, %v509
        %v536 = vpack.c.bf16 %v514, %v512
        %v537 = vpack.c.bf16 %v515, %v513
        %v538 = vpack.c.bf16 %v518, %v516
        %v539 = vpack.c.bf16 %v519, %v517
        %v540 = vpack.c.bf16 %v522, %v520
        %v541 = vpack.c.bf16 %v523, %v521
        %v542 = vpack.c.bf16 %v526, %v524
        %v543 = vpack.c.bf16 %v527, %v525
        %v544 = vld [vmem:[#allocation7] sm:$0xf]
        %v545 = vld [vmem:[#allocation7 + $0x4] sm:$0xf]
        %v546 = vld [vmem:[#allocation7 + $0x8] sm:$0xf]
        %v547 = vld [vmem:[#allocation7 + $0xc] sm:$0xf]
        %v552 = vunpack.c.l.b16 %v544
        %v553 = vunpack.c.l.b16 %v545
        %v554 = vunpack.c.l.b16 %v546
        %v555 = vunpack.c.l.b16 %v547
        %v556 = vpack.c.b16 %v553, %v552
        %v557 = vpack.c.b16 %v555, %v554
        %560 = vmatprep.subr.bf16.mxu0 %v409
        %561 = vmatpush1.bf16.msra.mxu0 %v408
        %562 = vmatprep.subr.bf16.mxu0 %v411
        %563 = vmatpush1.bf16.msra.mxu0 %v410
        %564 = vmatprep.subr.bf16.mxu0 %v413
        %565 = vmatpush1.bf16.msra.mxu0 %v412
        %566 = vmatprep.subr.bf16.mxu0 %v415
        %567 = vmatpush1.bf16.msra.mxu0 %v414
        %568 = vmatprep.subr.bf16.mxu0 %v417
        %569 = vmatpush1.bf16.msra.mxu0 %v416
        %570 = vmatprep.subr.bf16.mxu0 %v419
        %571 = vmatpush1.bf16.msra.mxu0 %v418
        %572 = vmatprep.subr.bf16.mxu0 %v421
        %573 = vmatpush1.bf16.msra.mxu0 %v420
        %574 = vmatprep.subr.bf16.mxu0 %v423
        %575 = vmatpush1.bf16.msra.mxu0 %v422
        %576 = vmatprep.subr.bf16.mxu0 0
        %577 = vmatpush1.bf16.msra.mxu0 0
        %578 = vmatprep.subr.bf16.mxu0 0
        %579 = vmatpush1.bf16.msra.mxu0 0
        %580 = vmatprep.subr.bf16.mxu0 0
        %581 = vmatpush1.bf16.msra.mxu0 0
        %582 = vmatprep.subr.bf16.mxu0 0
        %583 = vmatpush1.bf16.msra.mxu0 0
        %584 = vmatprep.subr.bf16.mxu0 0
        %585 = vmatpush1.bf16.msra.mxu0 0
        %586 = vmatprep.subr.bf16.mxu0 0
        %587 = vmatpush1.bf16.msra.mxu0 0
        %588 = vmatprep.subr.bf16.mxu0 0
        %589 = vmatpush1.bf16.msra.mxu0 0
        %590 = vmatprep.subr.bf16.mxu0 0
        %591 = vmatpush1.bf16.msra.mxu0 0
        %592 = vmatprep.mubr.bf16.mxu0 0
        %593 = vmatmul.mubr.bf16.gmra.mrb[0].mxu0 %v556
        %v594 = vpop.f32.mrb[0].mxu0
        %v595 = vadd.f32 0.0, %v594
        %v596 = vpop.f32.mrb[0].mxu0
        %v597 = vadd.f32 0.0, %v596
        %v598 = vpop.f32.mrb[0].mxu0
        %v599 = vadd.f32 0.0, %v598
        %v600 = vpop.f32.mrb[0].mxu0
        %v601 = vadd.f32 0.0, %v600
        %602 = vmatprep.mubr.bf16.mxu0 0
        %603 = vmatmul.mubr.bf16.gmra.mrb[0].mxu0 %v557
        %v604 = vpop.f32.mrb[0].mxu0
        %v605 = vadd.f32 0.0, %v604
        %v606 = vpop.f32.mrb[0].mxu0
        %v607 = vadd.f32 0.0, %v606
        %v608 = vpop.f32.mrb[0].mxu0
        %v609 = vadd.f32 0.0, %v608
        %v610 = vpop.f32.mrb[0].mxu0
        %v611 = vadd.f32 0.0, %v610
        %612 = vdwg.mxu0
        %v613 = vld [vmem:[#allocation8] sm:$0xf]
        %v614 = vld [vmem:[#allocation8 + $0x4] sm:$0xf]
        %v615 = vld [vmem:[#allocation8 + $0x8] sm:$0xf]
        %v616 = vld [vmem:[#allocation8 + $0xc] sm:$0xf]
        %v621 = vunpack.c.l.b16 %v613
        %v622 = vunpack.c.l.b16 %v614
        %v623 = vunpack.c.l.b16 %v615
        %v624 = vunpack.c.l.b16 %v616
        %v625 = vpack.c.b16 %v622, %v621
        %v626 = vpack.c.b16 %v624, %v623
        %629 = vmatprep.subr.bf16.mxu0 %v529
        %630 = vmatpush1.bf16.msra.mxu0 %v528
        %631 = vmatprep.subr.bf16.mxu0 %v531
        %632 = vmatpush1.bf16.msra.mxu0 %v530
        %633 = vmatprep.subr.bf16.mxu0 %v533
        %634 = vmatpush1.bf16.msra.mxu0 %v532
        %635 = vmatprep.subr.bf16.mxu0 %v535
        %636 = vmatpush1.bf16.msra.mxu0 %v534
        %637 = vmatprep.subr.bf16.mxu0 %v537
        %638 = vmatpush1.bf16.msra.mxu0 %v536
        %639 = vmatprep.subr.bf16.mxu0 %v539
        %640 = vmatpush1.bf16.msra.mxu0 %v538
        %641 = vmatprep.subr.bf16.mxu0 %v541
        %642 = vmatpush1.bf16.msra.mxu0 %v540
        %643 = vmatprep.subr.bf16.mxu0 %v543
        %644 = vmatpush1.bf16.msra.mxu0 %v542
        %645 = vmatprep.subr.bf16.mxu0 0
        %646 = vmatpush1.bf16.msra.mxu0 0
        %647 = vmatprep.subr.bf16.mxu0 0
        %648 = vmatpush1.bf16.msra.mxu0 0
        %649 = vmatprep.subr.bf16.mxu0 0
        %650 = vmatpush1.bf16.msra.mxu0 0
        %651 = vmatprep.subr.bf16.mxu0 0
        %652 = vmatpush1.bf16.msra.mxu0 0
        %653 = vmatprep.subr.bf16.mxu0 0
        %654 = vmatpush1.bf16.msra.mxu0 0
        %655 = vmatprep.subr.bf16.mxu0 0
        %656 = vmatpush1.bf16.msra.mxu0 0
        %657 = vmatprep.subr.bf16.mxu0 0
        %658 = vmatpush1.bf16.msra.mxu0 0
        %659 = vmatprep.subr.bf16.mxu0 0
        %660 = vmatpush1.bf16.msra.mxu0 0
        %661 = vmatprep.mubr.bf16.mxu0 0
        %662 = vmatmul.mubr.bf16.gmra.mrb[0].mxu0 %v625
        %v663 = vpop.f32.mrb[0].mxu0
        %v664 = vadd.f32 0.0, %v663
        %v665 = vpop.f32.mrb[0].mxu0
        %v666 = vadd.f32 0.0, %v665
        %v667 = vpop.f32.mrb[0].mxu0
        %v668 = vadd.f32 0.0, %v667
        %v669 = vpop.f32.mrb[0].mxu0
        %v670 = vadd.f32 0.0, %v669
        %671 = vmatprep.mubr.bf16.mxu0 0
        %672 = vmatmul.mubr.bf16.gmra.mrb[0].mxu0 %v626
        %v673 = vpop.f32.mrb[0].mxu0
        %v674 = vadd.f32 0.0, %v673
        %v675 = vpop.f32.mrb[0].mxu0
        %v676 = vadd.f32 0.0, %v675
        %v677 = vpop.f32.mrb[0].mxu0
        %v678 = vadd.f32 0.0, %v677
        %v679 = vpop.f32.mrb[0].mxu0
        %v680 = vadd.f32 0.0, %v679
        %681 = vdwg.mxu0
        %v682 = vmul.f32 %v595, %v664
        %v683 = vmul.f32 %v597, %v666
        %v684 = vmul.f32 %v599, %v668
        %v685 = vmul.f32 %v601, %v670
        %v686 = vmul.f32 %v605, %v674
        %v687 = vmul.f32 %v607, %v676
        %v688 = vmul.f32 %v609, %v678
        %v689 = vmul.f32 %v611, %v680
        %v690 = vadd.f32 %v682, %v684
        %v691 = vadd.f32 %v690, %v686
        %v692 = vadd.f32 %v691, %v688
        %v693 = vrot.slane %v692, 4
        %v694 = vadd.f32 %v692, %v693
        %v695 = vrot.slane %v694, 2
        %v696 = vadd.f32 %v694, %v695
        %v697 = vrot.slane %v696, 1
        %v698 = vadd.f32 %v696, %v697
        %v699 = vadd.f32 %v683, %v685
        %v700 = vadd.f32 %v699, %v687
        %v701 = vadd.f32 %v700, %v689
        %v702 = vrot.slane %v701, 4
        %v703 = vadd.f32 %v701, %v702
        %v704 = vrot.slane %v703, 2
        %v705 = vadd.f32 %v703, %v704
        %v706 = vrot.slane %v705, 1
        %v707 = vadd.f32 %v705, %v706
        %v708 = vsub.f32 0.0, %v698
        %v709 = vsub.f32 0.0, %v707
        %v710 = vmul.f32 %v708, 1.442695
        %v711 = vpow.pop %v710
        %v712 = vmul.f32 %v709, 1.442695
        %v713 = vpow.pop %v712
        %v714 = vadd.f32 %v711, 1.0
        %v715 = vadd.f32 %v713, 1.0
        %v716 = vrcp.pop %v714
        %v717 = vrcp.pop %v715
        %v720 = vcombine.low %v716, %v717
        %v722 = vunpack.c.l.s4 1966171168
        %v723 = vunpack.c.0.s8 %v722
        %v724 = vlaneseq
        %v725 = vshrl.u32 %v724, 7
        %v726 = vsub.s32 %v723, %v725
        %v727 = vrot.slane %v720, %v726
        %v729 = vunpack.c.l.s4 1966171168
        %v730 = vunpack.c.0.s8 %v729
        %v731 = vlaneseq
        %v732 = vshrl.u32 %v731, 7
        %v733 = vsub.s32 %v730, %v732
        %v734 = vrot.slane %v727, %v733
        %v736 = vlaneseq
        %vm737 = vcmp.ge.s32.totalorder %v736, 0
        %vm738 = vcmp.lt.s32.totalorder %v736, 256
        %vm739 = vmand %vm737, %vm738
        %740 = vst.msk [vmem:[%s280] sm:$0x3] %vm739, %v734
        %s741 = sand.u32 %s127, 1
        %s742 = scalar_lea.sflag [#allocation4], %s741
        %s743 = sand.u32 %s127, 1
        %s744 = smul.addr %s743, 2
        %s745 = scalar_lea.vmem [#allocation10], %s744
        // Predicated region
        $region53: #{tpu_custom_call.1} parent=35 // pred_check
          %p746 = pneg %p137
        $region54: #{tpu_custom_call.1} parent=35 // pred_check_branch
          %748 = sbr.rel (%p746) target = $region56
        $region55: #{tpu_custom_call.1} parent=35 // pred_region
          %s749 = smul.u32 2, %s25
          %s751 = ssub.s32 32, 32
          %752 = vsyncadd %s742, %s751
          %s753 = smul.addr %s749, 16
          %s754 = scalar_lea.hbm %s4, %s753
          %s756 = sshll.u32 %s745, 4
          %s757 = int_to_ptr.vmem [resolvable:$true] %s756
          %759 = dma.vmem_to_hbm [thread:$0]  %s757, 32, %s754, %s742
        $region56: #{tpu_custom_call.1} parent=35 // pred_fallthru
          _
      $region36: #{tpu_custom_call.1} parent=5 // pred_fallthru
        _
      %p760 = scmp.le.s32.totalorder 2, %s20
      // Predicated region
      $region57: #{tpu_custom_call.1} parent=5 // pred_check
        %p761 = pneg %p760
      $region58: #{tpu_custom_call.1} parent=5 // pred_check_branch
        %763 = sbr.rel (%p761) target = $region60
      $region59: #{tpu_custom_call.1} parent=5 // pred_region
        %s764 = ssub.s32 %s20, 2
        // Predicated region
        $region61: #{tpu_custom_call.1} parent=59 // pred_check
          %p765 = pneg %p143
        $region62: #{tpu_custom_call.1} parent=59 // pred_check_branch
          %767 = sbr.rel (%p765) target = $region64
        $region63: #{tpu_custom_call.1} parent=59 // pred_region
          %s768 = sand.u32 %s128, 1
          %s769 = scalar_lea.sflag [#allocation4], %s768
          %s770 = sand.u32 %s128, 1
          %s771 = smul.addr %s770, 2
          %s772 = scalar_lea.vmem [#allocation10], %s771
          %773 = dma.done %s769, 32
        $region64: #{tpu_custom_call.1} parent=59 // pred_fallthru
          _
      $region60: #{tpu_custom_call.1} parent=5 // pred_fallthru
        _
    $region6: #{tpu_custom_call.1} parent=1 // loop_footer
      %s24 = sadd.s32 1, %s20
    $region7: #{tpu_custom_call.1} parent=1 // loop_footer_branch
      %19 = sbr.rel target = $region3
    $region8: #{tpu_custom_call.1} parent=1 // loop_exit
      _
    %774 = vsyncpa [#allocation3], 1
    %s775 = scalar_lea.sflag [#allocation3], 1
    %776 = vsyncpa %s775, 1
    %777 = vsyncpa [#allocation6], 1
    %s778 = scalar_lea.sflag [#allocation6], 1
    %779 = vsyncpa %s778, 1
    %780 = vsyncpa [#allocation9], 1
    %781 = vsyncpa [#allocation4], 1
    %s782 = scalar_lea.sflag [#allocation4], 1
    %783 = vsyncpa %s782, 1

</llo_original>
